<compile_context>
chip_gen: v7x
topology: tpu7x:2x2x1
jax: 0.10.0
libtpu: 0.0.40
codegen_flags: <defaults>
</compile_context>

<pallas_src>
import jax
import jax.numpy as jnp
from jax import lax
from jax.experimental import pallas as pl
from jax.experimental.pallas import tpu as pltpu

LRELU_SLOPE = 0.1
KERNEL_SIZE = 3
DILATIONS = (1, 3)

# Halo on each side of the time axis in the staging scratch.  Must cover the
# largest shift dilation * (KERNEL_SIZE // 2) = 3; 16 keeps the big center-
# window store aligned to the bf16 (16, 128) tile.
PAD_T = 16

# MXU operand dtype.  bf16 is the native MXU rate on v5e/v6e/v7x and halves
# weight DMA + scratch traffic; accumulation is f32 via preferred_element_type
# and the residual/bias path stays f32 in vregs.
MXU_DTYPE = jnp.bfloat16

# Per-grid-step activation block budget.  Small (~1 MiB) so double-buffered
# in/out blocks + halo scratch + single-buffered weights stay inside v7x's
# 64 MiB physical VMEM and v5e's 16 MiB default scoped limit with headroom.
BLOCK_TARGET_BYTES = 1 << 20


def _vmem_limit_bytes():
    """Generation-aware scoped-VMEM limit (~3/4 of physical, capped at 96 MiB)."""
    try:
        cap = pltpu.get_tpu_info().vmem_capacity_bytes
    except Exception:
        cap = 64 << 20            # conservative fallback (v7x physical)
    return int(min(cap * 3 // 4, 96 << 20))


VMEM_LIMIT_BYTES = _vmem_limit_bytes()


def _const_spec(block_shape, index_map):
    """BlockSpec for a grid-invariant operand: single-buffered to save VMEM.

    Falls back to a default spec if this JAX build's BlockSpec has no
    pipeline_mode / Buffered support.
    """
    try:
        return pl.BlockSpec(block_shape, index_map, pipeline_mode=pl.Buffered(1))
    except (TypeError, AttributeError):
        return pl.BlockSpec(block_shape, index_map)


def resblock2_kernel(x_ref, w1_ref, b1_ref, w2_ref, b2_ref, o_ref, pad_ref):
    # x_ref / o_ref: (B_blk, T, Cp) f32.   w*_ref: (K, Cp, Cp) tap-major,
    # MXU_DTYPE.   b*_ref: (1, Cp) f32.
    # pad_ref: (B_blk, T + 2*PAD_T, Cp) MXU_DTYPE halo-padded staging scratch.
    Bb, T, Cp = x_ref.shape
    M = Bb * T

    # Zero only the halo rows (they provide the conv's "same" zero padding).
    # Re-zeroed every step on purpose: under v7x megacore grid splitting each
    # TensorCore owns its own scratch, so a "first step only" guard is unsafe.
    halo = jnp.zeros((Bb, PAD_T, Cp), pad_ref.dtype)
    pad_ref[:, :PAD_T, :] = halo
    pad_ref[:, PAD_T + T:, :] = halo

    x = x_ref[...].astype(jnp.float32)          # residual path stays f32

    for w_ref, b_ref, d in ((w1_ref, b1_ref, DILATIONS[0]),
                            (w2_ref, b2_ref, DILATIONS[1])):
        # leaky_relu(x, 0.1) as a single VPU max; leaky_relu(0) == 0, so the
        # zero halo matches "zero-pad after the activation".
        xt = jnp.maximum(x, LRELU_SLOPE * x)
        xt_n = xt.astype(pad_ref.dtype)          # bf16 MXU operand
        pad_ref[:, PAD_T:PAD_T + T, :] = xt_n

        left = pad_ref[:, PAD_T - d:PAD_T - d + T, :]    # x[t - d]  (tap 0)
        right = pad_ref[:, PAD_T + d:PAD_T + d + T, :]   # x[t + d]  (tap 2)

        # Three accumulating (M, Cp) @ (Cp, Cp) matmuls — one per tap — instead
        # of a channel-axis concat: no 3x-block VMEM temporary, fewer vst
        # passes, and each contraction already fills the MXU at Cp >= 128.
        y = jnp.dot(left.reshape(M, Cp), w_ref[0],
                    preferred_element_type=jnp.float32)
        y = y + jnp.dot(xt_n.reshape(M, Cp), w_ref[1],
                        preferred_element_type=jnp.float32)
        y = y + jnp.dot(right.reshape(M, Cp), w_ref[2],
                        preferred_element_type=jnp.float32)

        # Bias + residual folded into the epilogue (no zero-init accumulator).
        x = x + b_ref[...] + y.reshape(Bb, T, Cp)

    o_ref[...] = x.astype(o_ref.dtype)


def _round_up(v, m):
    return -(-v // m) * m


def _choose_batch_block(B, T, Cp, bytes_per_elem=4,
                        target_bytes=BLOCK_TARGET_BYTES, min_steps=2):
    """Largest divisor of B whose (B_blk, T, Cp) block stays near target_bytes,
    while keeping at least `min_steps` grid steps (when B allows it) so v7x's
    second TensorCore gets work under dimension_semantics=('parallel',)."""
    per_batch = max(1, T * Cp * bytes_per_elem)
    bb = max(1, min(B, target_bytes // per_batch))
    if B >= min_steps:
        bb = min(bb, max(1, B // min_steps))
    bb = max(bb, 1)
    while B % bb:
        bb -= 1
    return bb


def resblock2_forward_btc(x_btc, w1_kcc, b1_row, w2_kcc, b2_row):
    """Channels-last core: x (B, T, Cp) f32 with Cp a multiple of 128; weights
    (K, Cp, Cp) tap-major in MXU_DTYPE; biases (1, Cp) f32.  Keeping the whole
    MRF stack resident in this layout amortizes the NCL<->NTC transposes."""
    B, T, Cp = x_btc.shape
    K = w1_kcc.shape[0]

    B_blk = _choose_batch_block(B, T, Cp)
    grid = (B // B_blk,)
    # TODO(synk): tile the time axis with an overlapping +/-4-sample halo
    # window (or a small manual halo DMA) when a single batch's (T, Cp) block
    # exceeds the VMEM budget at production T/C; for the shapes exercised here
    # batch tiling alone is sufficient.

    return pl.pallas_call(
        resblock2_kernel,
        out_shape=jax.ShapeDtypeStruct((B, T, Cp), x_btc.dtype),
        grid_spec=pltpu.PrefetchScalarGridSpec(
            num_scalar_prefetch=0,
            grid=grid,
            in_specs=[
                pl.BlockSpec((B_blk, T, Cp), lambda i: (i, 0, 0)),    # x
                _const_spec((K, Cp, Cp), lambda i: (0, 0, 0)),        # w1
                _const_spec((1, Cp), lambda i: (0, 0)),               # b1
                _const_spec((K, Cp, Cp), lambda i: (0, 0, 0)),        # w2
                _const_spec((1, Cp), lambda i: (0, 0)),               # b2
            ],
            out_specs=pl.BlockSpec((B_blk, T, Cp), lambda i: (i, 0, 0)),
            scratch_shapes=[
                # Halo-padded bf16 staging buffer for the dilated time shifts.
                pltpu.VMEM((B_blk, T + 2 * PAD_T, Cp), MXU_DTYPE),
            ],
        ),
        input_output_aliases={0: 0},          # write result in place of x
        compiler_params=pltpu.CompilerParams(
            dimension_semantics=("parallel",),
            vmem_limit_bytes=VMEM_LIMIT_BYTES,
        ),
    )(x_btc, w1_kcc, b1_row, w2_kcc, b2_row)


@jax.jit
def resblock2_forward(x_ncl, w1_oik, b1, w2_oik, b2):
    """PyTorch layouts in/out: x (B, C, T); w (C_out, C_in, K); b (C,)."""
    B, C, T = x_ncl.shape
    K = w1_oik.shape[-1]
    Cp = _round_up(max(C, 128), 128)          # lane-dense channel count

    # TODO(synk): in the full MRF/HiFi-GAN stack keep activations resident in
    # (B, T, Cp) and call resblock2_forward_btc directly so this NCL<->NTC
    # transpose + channel pad happens once per network, not twice per ResBlock.
    x_btc = jnp.transpose(x_ncl, (0, 2, 1))
    if Cp != C:
        x_btc = jnp.pad(x_btc, ((0, 0), (0, 0), (0, Cp - C)))

    def prep(w_oik, b):
        w = jnp.transpose(w_oik, (2, 1, 0))                  # (K, C_in, C_out)
        if Cp != C:
            w = jnp.pad(w, ((0, 0), (0, Cp - C), (0, Cp - C)))
            b = jnp.pad(b, ((0, Cp - C),))
        return w.astype(MXU_DTYPE), b[None, :].astype(jnp.float32)

    w1_kcc, b1_row = prep(w1_oik, b1)
    w2_kcc, b2_row = prep(w2_oik, b2)

    out = resblock2_forward_btc(x_btc, w1_kcc, b1_row, w2_kcc, b2_row)

    out = out[:, :, :C] if Cp != C else out
    return jnp.transpose(out, (0, 2, 1))                     # back to NCL


def make_weightnorm_conv_params(key, channels, kernel_size):
    """Deterministic synthetic weight_norm(Conv1d) parameters.

    weight_norm reparam: w = g * v / ||v||, norm per output channel.
    init_weights sets v ~ N(0, 0.01); at weight_norm init g = ||v||, so the
    effective weight equals v.  Bias uses PyTorch's U(-1/sqrt(fan_in), ...).
    """
    kv, kb = jax.random.split(key)
    v = 0.01 * jax.random.normal(kv, (channels, channels, kernel_size),
                                 jnp.float32)
    norm = jnp.sqrt(jnp.sum(v * v, axis=(1, 2), keepdims=True))
    g = norm
    w_eff = g * v / norm                                     # (C_out, C_in, K)
    fan_in = channels * kernel_size
    bound = 1.0 / jnp.sqrt(jnp.float32(fan_in))
    bias = jax.random.uniform(kb, (channels,), jnp.float32, -bound, bound)
    return w_eff, bias


def resblock2_reference(x_ncl, w1_oik, b1, w2_oik, b2):
    """Pure-JAX f32 reference matching torch semantics (NCL, OIK weights)."""
    x = x_ncl
    for w, b, d in ((w1_oik, b1, DILATIONS[0]), (w2_oik, b2, DILATIONS[1])):
        xt = jnp.where(x > 0, x, LRELU_SLOPE * x)
        pad = d * (KERNEL_SIZE - 1) // 2
        y = lax.conv_general_dilated(
            xt, w,
            window_strides=(1,),
            padding=[(pad, pad)],
            rhs_dilation=(d,),
            dimension_numbers=("NCH", "OIH", "NCH"),
        )
        x = y + b[None, :, None] + x
    return x


if __name__ == "__main__":
    # Small shapes consistent with Conv1d(channels, channels, 3): (B, C, T)
    B, C, T = 2, 64, 128

    root = jax.random.PRNGKey(0)
    kx, kw1, kw2 = jax.random.split(root, 3)

    x_ncl = jax.random.normal(kx, (B, C, T), jnp.float32)    # PyTorch layout NCL
    w1_oik, b1 = make_weightnorm_conv_params(kw1, C, KERNEL_SIZE)
    w2_oik, b2 = make_weightnorm_conv_params(kw2, C, KERNEL_SIZE)

    out_ncl = resblock2_forward(x_ncl, w1_oik, b1, w2_oik, b2)
    out_ncl = jax.block_until_ready(out_ncl)

    ref_ncl = resblock2_reference(x_ncl, w1_oik, b1, w2_oik, b2)
    # bf16 MXU operands (f32 accumulation, f32 residual) -> relaxed tolerance
    # vs the strict-f32 reference, as flagged in the performance review.
    if not jnp.allclose(out_ncl, ref_ncl, atol=2e-2, rtol=2e-2):
        raise AssertionError("Pallas ResBlock2 output mismatch vs reference")

    print("KERNEL_OK")
</pallas_src>

<mosaic_0001>
module attributes {stable_mosaic.version = 11 : i64} {
  func.func @resblock2_kernel(%arg0: i32, %arg1: memref<1x128x128xf32, #tpu.memory_space<vmem>>, %arg2: memref<3x128x128xbf16, #tpu.memory_space<vmem>>, %arg3: memref<1x128xf32, #tpu.memory_space<vmem>>, %arg4: memref<3x128x128xbf16, #tpu.memory_space<vmem>>, %arg5: memref<1x128xf32, #tpu.memory_space<vmem>>, %arg6: memref<1x128x128xf32, #tpu.memory_space<vmem>>, %arg7: memref<1x160x128xbf16, #tpu.memory_space<vmem>>) attributes {dimension_semantics = [#tpu.dimension_semantics<parallel>], iteration_bounds = array<i64: 2>, scalar_prefetch = 0 : i64, scratch_operands = 1 : i64, tpu.core_type = #tpu.core_type<tc>, window_params = [{transform_indices = @transform_0, window_bounds = array<i64: 1, 128, 128>}, {pipeline_mode = #tpu.pipeline_mode<synchronous>, transform_indices = @transform_1, window_bounds = array<i64: 3, 128, 128>}, {pipeline_mode = #tpu.pipeline_mode<synchronous>, transform_indices = @transform_2, window_bounds = array<i64: 1, 128>}, {pipeline_mode = #tpu.pipeline_mode<synchronous>, transform_indices = @transform_3, window_bounds = array<i64: 3, 128, 128>}, {pipeline_mode = #tpu.pipeline_mode<synchronous>, transform_indices = @transform_4, window_bounds = array<i64: 1, 128>}, {transform_indices = @transform_5, window_bounds = array<i64: 1, 128, 128>}]} {
    %cst = arith.constant 0.000000e+00 : bf16
    %0 = vector.broadcast %cst : bf16 to vector<1x16x128xbf16>
    %c0 = arith.constant 0 : index
    %c0_0 = arith.constant 0 : index
    %c0_1 = arith.constant 0 : index
    %1 = vector.load %arg7[%c0, %c0_0, %c0_1] : memref<1x160x128xbf16, #tpu.memory_space<vmem>>, vector<1x16x128xbf16>
    tpu.vector_store %arg7[%c0, %c0_0, %c0_1], %0 {strides = array<i32>} : memref<1x160x128xbf16, #tpu.memory_space<vmem>>, vector<1x16x128xbf16>,
    %c0_2 = arith.constant 0 : index
    %c144 = arith.constant 144 : index
    %c0_3 = arith.constant 0 : index
    %2 = vector.load %arg7[%c0_2, %c144, %c0_3] : memref<1x160x128xbf16, #tpu.memory_space<vmem>>, vector<1x16x128xbf16>
    tpu.vector_store %arg7[%c0_2, %c144, %c0_3], %0 {strides = array<i32>} : memref<1x160x128xbf16, #tpu.memory_space<vmem>>, vector<1x16x128xbf16>,
    %c0_4 = arith.constant 0 : index
    %c0_5 = arith.constant 0 : index
    %c0_6 = arith.constant 0 : index
    %3 = vector.load %arg1[%c0_4, %c0_5, %c0_6] : memref<1x128x128xf32, #tpu.memory_space<vmem>>, vector<1x128x128xf32>
    %cst_7 = arith.constant 1.000000e-01 : f32
    %4 = vector.broadcast %cst_7 : f32 to vector<1x128x128xf32>
    %5 = arith.mulf %4, %3 : vector<1x128x128xf32>
    %6 = arith.maximumf %3, %5 : vector<1x128x128xf32>
    %7 = arith.truncf %6 : vector<1x128x128xf32> to vector<1x128x128xbf16>
    %c0_8 = arith.constant 0 : index
    %c16 = arith.constant 16 : index
    %c0_9 = arith.constant 0 : index
    %8 = vector.load %arg7[%c0_8, %c16, %c0_9] : memref<1x160x128xbf16, #tpu.memory_space<vmem>>, vector<1x128x128xbf16>
    tpu.vector_store %arg7[%c0_8, %c16, %c0_9], %7 {strides = array<i32>} : memref<1x160x128xbf16, #tpu.memory_space<vmem>>, vector<1x128x128xbf16>,
    %c0_10 = arith.constant 0 : index
    %c15 = arith.constant 15 : index
    %c0_11 = arith.constant 0 : index
    %9 = vector.load %arg7[%c0_10, %c15, %c0_11] : memref<1x160x128xbf16, #tpu.memory_space<vmem>>, vector<1x128x128xbf16>
    %c0_12 = arith.constant 0 : index
    %c17 = arith.constant 17 : index
    %c0_13 = arith.constant 0 : index
    %10 = vector.load %arg7[%c0_12, %c17, %c0_13] : memref<1x160x128xbf16, #tpu.memory_space<vmem>>, vector<1x128x128xbf16>
    %11 = vector.shape_cast %9 : vector<1x128x128xbf16> to vector<128x128xbf16>
    %c0_14 = arith.constant 0 : index
    %c0_15 = arith.constant 0 : index
    %c0_16 = arith.constant 0 : index
    %12 = vector.load %arg2[%c0_14, %c0_15, %c0_16] : memref<3x128x128xbf16, #tpu.memory_space<vmem>>, vector<1x128x128xbf16>
    %13 = vector.shape_cast %12 : vector<1x128x128xbf16> to vector<128x128xbf16>
    %cst_17 = arith.constant dense<0.000000e+00> : vector<128x128xf32>
    %14 = tpu.matmul %11, %13, %cst_17 {dimension_numbers = #tpu.dot_dimension_numbers<[1], [0], [0], [1], [0, 0, 1, 1], [], []>} : vector<128x128xbf16>, vector<128x128xbf16>, vector<128x128xf32> -> vector<128x128xf32>
    %15 = vector.shape_cast %7 : vector<1x128x128xbf16> to vector<128x128xbf16>
    %c1 = arith.constant 1 : index
    %c0_18 = arith.constant 0 : index
    %c0_19 = arith.constant 0 : index
    %16 = vector.load %arg2[%c1, %c0_18, %c0_19] : memref<3x128x128xbf16, #tpu.memory_space<vmem>>, vector<1x128x128xbf16>
    %17 = vector.shape_cast %16 : vector<1x128x128xbf16> to vector<128x128xbf16>
    %cst_20 = arith.constant dense<0.000000e+00> : vector<128x128xf32>
    %18 = tpu.matmul %15, %17, %cst_20 {dimension_numbers = #tpu.dot_dimension_numbers<[1], [0], [0], [1], [0, 0, 1, 1], [], []>} : vector<128x128xbf16>, vector<128x128xbf16>, vector<128x128xf32> -> vector<128x128xf32>
    %19 = arith.addf %14, %18 : vector<128x128xf32>
    %20 = vector.shape_cast %10 : vector<1x128x128xbf16> to vector<128x128xbf16>
    %c2 = arith.constant 2 : index
    %c0_21 = arith.constant 0 : index
    %c0_22 = arith.constant 0 : index
    %21 = vector.load %arg2[%c2, %c0_21, %c0_22] : memref<3x128x128xbf16, #tpu.memory_space<vmem>>, vector<1x128x128xbf16>
    %22 = vector.shape_cast %21 : vector<1x128x128xbf16> to vector<128x128xbf16>
    %cst_23 = arith.constant dense<0.000000e+00> : vector<128x128xf32>
    %23 = tpu.matmul %20, %22, %cst_23 {dimension_numbers = #tpu.dot_dimension_numbers<[1], [0], [0], [1], [0, 0, 1, 1], [], []>} : vector<128x128xbf16>, vector<128x128xbf16>, vector<128x128xf32> -> vector<128x128xf32>
    %24 = arith.addf %19, %23 : vector<128x128xf32>
    %c0_24 = arith.constant 0 : index
    %c0_25 = arith.constant 0 : index
    %25 = vector.load %arg3[%c0_24, %c0_25] : memref<1x128xf32, #tpu.memory_space<vmem>>, vector<1x128xf32>
    %26 = vector.shape_cast %25 : vector<1x128xf32> to vector<1x1x128xf32>
    %27 = vector.broadcast %26 : vector<1x1x128xf32> to vector<1x128x128xf32>
    %28 = arith.addf %3, %27 : vector<1x128x128xf32>
    %29 = vector.shape_cast %24 : vector<128x128xf32> to vector<1x128x128xf32>
    %30 = arith.addf %28, %29 : vector<1x128x128xf32>
    %cst_26 = arith.constant 1.000000e-01 : f32
    %31 = vector.broadcast %cst_26 : f32 to vector<1x128x128xf32>
    %32 = arith.mulf %31, %30 : vector<1x128x128xf32>
    %33 = arith.maximumf %30, %32 : vector<1x128x128xf32>
    %34 = arith.truncf %33 : vector<1x128x128xf32> to vector<1x128x128xbf16>
    %c0_27 = arith.constant 0 : index
    %c16_28 = arith.constant 16 : index
    %c0_29 = arith.constant 0 : index
    %35 = vector.load %arg7[%c0_27, %c16_28, %c0_29] : memref<1x160x128xbf16, #tpu.memory_space<vmem>>, vector<1x128x128xbf16>
    tpu.vector_store %arg7[%c0_27, %c16_28, %c0_29], %34 {strides = array<i32>} : memref<1x160x128xbf16, #tpu.memory_space<vmem>>, vector<1x128x128xbf16>,
    %c0_30 = arith.constant 0 : index
    %c13 = arith.constant 13 : index
    %c0_31 = arith.constant 0 : index
    %36 = vector.load %arg7[%c0_30, %c13, %c0_31] : memref<1x160x128xbf16, #tpu.memory_space<vmem>>, vector<1x128x128xbf16>
    %c0_32 = arith.constant 0 : index
    %c19 = arith.constant 19 : index
    %c0_33 = arith.constant 0 : index
    %37 = vector.load %arg7[%c0_32, %c19, %c0_33] : memref<1x160x128xbf16, #tpu.memory_space<vmem>>, vector<1x128x128xbf16>
    %38 = vector.shape_cast %36 : vector<1x128x128xbf16> to vector<128x128xbf16>
    %c0_34 = arith.constant 0 : index
    %c0_35 = arith.constant 0 : index
    %c0_36 = arith.constant 0 : index
    %39 = vector.load %arg4[%c0_34, %c0_35, %c0_36] : memref<3x128x128xbf16, #tpu.memory_space<vmem>>, vector<1x128x128xbf16>
    %40 = vector.shape_cast %39 : vector<1x128x128xbf16> to vector<128x128xbf16>
    %cst_37 = arith.constant dense<0.000000e+00> : vector<128x128xf32>
    %41 = tpu.matmul %38, %40, %cst_37 {dimension_numbers = #tpu.dot_dimension_numbers<[1], [0], [0], [1], [0, 0, 1, 1], [], []>} : vector<128x128xbf16>, vector<128x128xbf16>, vector<128x128xf32> -> vector<128x128xf32>
    %42 = vector.shape_cast %34 : vector<1x128x128xbf16> to vector<128x128xbf16>
    %c1_38 = arith.constant 1 : index
    %c0_39 = arith.constant 0 : index
    %c0_40 = arith.constant 0 : index
    %43 = vector.load %arg4[%c1_38, %c0_39, %c0_40] : memref<3x128x128xbf16, #tpu.memory_space<vmem>>, vector<1x128x128xbf16>
    %44 = vector.shape_cast %43 : vector<1x128x128xbf16> to vector<128x128xbf16>
    %cst_41 = arith.constant dense<0.000000e+00> : vector<128x128xf32>
    %45 = tpu.matmul %42, %44, %cst_41 {dimension_numbers = #tpu.dot_dimension_numbers<[1], [0], [0], [1], [0, 0, 1, 1], [], []>} : vector<128x128xbf16>, vector<128x128xbf16>, vector<128x128xf32> -> vector<128x128xf32>
    %46 = arith.addf %41, %45 : vector<128x128xf32>
    %47 = vector.shape_cast %37 : vector<1x128x128xbf16> to vector<128x128xbf16>
    %c2_42 = arith.constant 2 : index
    %c0_43 = arith.constant 0 : index
    %c0_44 = arith.constant 0 : index
    %48 = vector.load %arg4[%c2_42, %c0_43, %c0_44] : memref<3x128x128xbf16, #tpu.memory_space<vmem>>, vector<1x128x128xbf16>
    %49 = vector.shape_cast %48 : vector<1x128x128xbf16> to vector<128x128xbf16>
    %cst_45 = arith.constant dense<0.000000e+00> : vector<128x128xf32>
    %50 = tpu.matmul %47, %49, %cst_45 {dimension_numbers = #tpu.dot_dimension_numbers<[1], [0], [0], [1], [0, 0, 1, 1], [], []>} : vector<128x128xbf16>, vector<128x128xbf16>, vector<128x128xf32> -> vector<128x128xf32>
    %51 = arith.addf %46, %50 : vector<128x128xf32>
    %c0_46 = arith.constant 0 : index
    %c0_47 = arith.constant 0 : index
    %52 = vector.load %arg5[%c0_46, %c0_47] : memref<1x128xf32, #tpu.memory_space<vmem>>, vector<1x128xf32>
    %53 = vector.shape_cast %52 : vector<1x128xf32> to vector<1x1x128xf32>
    %54 = vector.broadcast %53 : vector<1x1x128xf32> to vector<1x128x128xf32>
    %55 = arith.addf %30, %54 : vector<1x128x128xf32>
    %56 = vector.shape_cast %51 : vector<128x128xf32> to vector<1x128x128xf32>
    %57 = arith.addf %55, %56 : vector<1x128x128xf32>
    %c0_48 = arith.constant 0 : index
    %c0_49 = arith.constant 0 : index
    %c0_50 = arith.constant 0 : index
    %58 = vector.load %arg6[%c0_48, %c0_49, %c0_50] : memref<1x128x128xf32, #tpu.memory_space<vmem>>, vector<1x128x128xf32>
    tpu.vector_store %arg6[%c0_48, %c0_49, %c0_50], %57 {strides = array<i32>} : memref<1x128x128xf32, #tpu.memory_space<vmem>>, vector<1x128x128xf32>,
    return
  }
  func.func @transform_0(%arg0: i32) -> (i32, i32, i32) {
    %c0_i32 = arith.constant 0 : i32
    %c0_i32_0 = arith.constant 0 : i32
    %c0_i32_1 = arith.constant 0 : i32
    return %arg0, %c0_i32, %c0_i32_0 : i32, i32, i32
  }
  func.func @transform_1(%arg0: i32) -> (i32, i32, i32) {
    %c0_i32 = arith.constant 0 : i32
    %c0_i32_0 = arith.constant 0 : i32
    %c0_i32_1 = arith.constant 0 : i32
    %c0_i32_2 = arith.constant 0 : i32
    return %c0_i32, %c0_i32_0, %c0_i32_1 : i32, i32, i32
  }
  func.func @transform_2(%arg0: i32) -> (i32, i32) {
    %c0_i32 = arith.constant 0 : i32
    %c0_i32_0 = arith.constant 0 : i32
    %c0_i32_1 = arith.constant 0 : i32
    return %c0_i32, %c0_i32_0 : i32, i32
  }
  func.func @transform_3(%arg0: i32) -> (i32, i32, i32) {
    %c0_i32 = arith.constant 0 : i32
    %c0_i32_0 = arith.constant 0 : i32
    %c0_i32_1 = arith.constant 0 : i32
    %c0_i32_2 = arith.constant 0 : i32
    return %c0_i32, %c0_i32_0, %c0_i32_1 : i32, i32, i32
  }
  func.func @transform_4(%arg0: i32) -> (i32, i32) {
    %c0_i32 = arith.constant 0 : i32
    %c0_i32_0 = arith.constant 0 : i32
    %c0_i32_1 = arith.constant 0 : i32
    return %c0_i32, %c0_i32_0 : i32, i32
  }
  func.func @transform_5(%arg0: i32) -> (i32, i32, i32) {
    %c0_i32 = arith.constant 0 : i32
    %c0_i32_0 = arith.constant 0 : i32
    %c0_i32_1 = arith.constant 0 : i32
    return %arg0, %c0_i32, %c0_i32_0 : i32, i32, i32
  }
}

</mosaic_0001>

<llo_original>
// kernel: resblock2_forward.1
$region0: #{resblock2_forward.1}
  #allocation0 [shape = 'u32[]', space=smem, size = 0x4, offset = 0x4, fixed_abs, tag = 'smem constant byte address 0x4 - core index']
  #allocation1 [shape = 'u32[144,128]{1,0:T(1,128)}', space=vmem, size = 0x12000, scoped, tag = 'internal scratch']
  #allocation2 [shape = 'bf16[1,160,128]{2,1,0:T(16,128)(2,1)}', space=vmem, size = 0xa000, scoped, tag = 'scratch operand']
  %s0 = inlined_call_operand.vmem [shape: f32[2,128,128], index: 0, kind: input, shape index: {}, may-alias: {0,5}]
  %s1 = inlined_call_operand.vmem [shape: bf16[3,128,128], index: 1, kind: input, shape index: {}]
  %s2 = inlined_call_operand.vmem [shape: f32[1,128], index: 2, kind: input, shape index: {}]
  %s3 = inlined_call_operand.vmem [shape: bf16[3,128,128], index: 3, kind: input, shape index: {}]
  %s4 = inlined_call_operand.vmem [shape: f32[1,128], index: 4, kind: input, shape index: {}]
  %s5 = inlined_call_operand.vmem [shape: f32[2,128,128], index: 5, kind: output, shape index: {}, may-alias: {0,5}]
  %s6 = sld [smem:[#allocation0]]
  $region53: #{resblock2_forward.1} parent=0
    _
  %s8 = ssub.s32 1, %s6
  %s9 = scalar_select 0, %s8, %s6
  loop: start=0, step=1, limit=4
  $region2: #{resblock2_forward.1} parent=0 // loop_pre_header
    _
  $region3: #{resblock2_forward.1} parent=0 // loop_header
    %s11 = sphi 0, %s15
    %p12 = scmp.ge.s32.totalorder %s11, 4
    %s21 = sphi 0, %s23
    %s24 = sphi 0, %s21
    %s25 = sphi 0, %s24
    %s41 = sphi 0, %s25
    %s45 = sphi 0, %s45
    %s47 = sphi 0, %s45
    %s48 = sphi 0, %s47
    %s62 = sphi 0, %s48
    %s66 = sphi 0, %s66
    %s68 = sphi 0, %s66
    %s69 = sphi 0, %s68
    %s83 = sphi 0, %s69
    %s87 = sphi 0, %s87
    %s89 = sphi 0, %s87
    %s90 = sphi 0, %s89
    %s104 = sphi 0, %s90
    %s108 = sphi 0, %s108
    %s110 = sphi 0, %s108
    %s111 = sphi 0, %s110
    %s125 = sphi 0, %s111
    %s131 = sphi 0, %s133
    %s134 = sphi 0, %s131
    %s135 = sphi 0, %s134
    %s151 = sphi 0, %s135
  $region4: #{resblock2_forward.1} parent=0 // loop_header_branch
    %14 = sbr.rel (%p12) target = $region8
  $region5: #{resblock2_forward.1} parent=0 // loop_body
    %s16 = ssub.s32 %s11, 1
    %s17 = ssub.s32 %s11, 2
    %s18 = sadd.s32 %s11, 1
    %s19 = ssub.s32 %s11, %s18
    %p20 = scmp.eq.s32.totalorder %s19, 0
    %s22 = sadd.s32 %s21, 1
    %s23 = scalar_select %p20, %s21, %s22
    %p26 = pneg %p20
    %p27 = scmp.eq.s32.totalorder %s11, 1
    %p28 = por %p26, %p27
    %p29 = scmp.ne.s32.totalorder %s21, %s24
    %p30 = scmp.eq.s32.totalorder %s11, 0
    %p31 = por %p29, %p30
    %p32 = scmp.ne.s32.totalorder %s21, %s24
    %p33 = scmp.eq.s32.totalorder %s16, 1
    %p34 = por %p32, %p33
    %p35 = scmp.ne.s32.totalorder %s24, %s25
    %p36 = scmp.eq.s32.totalorder %s16, 0
    %p37 = por %p35, %p36
    %p38 = scmp.ne.s32.totalorder %s24, %s25
    %p39 = scmp.eq.s32.totalorder %s17, 1
    %p40 = por %p38, %p39
    %p42 = scmp.ne.s32.totalorder %s25, %s41
    %p43 = scmp.eq.s32.totalorder %s17, 0
    %p44 = por %p42, %p43
    %s46 = sadd.s32 %s45, 1
    %p49 = scmp.eq.s32.totalorder %s11, 1
    %p50 = scmp.ne.s32.totalorder %s45, %s47
    %p51 = scmp.eq.s32.totalorder %s11, 0
    %p52 = por %p50, %p51
    %p53 = scmp.ne.s32.totalorder %s45, %s47
    %p54 = scmp.eq.s32.totalorder %s16, 1
    %p55 = por %p53, %p54
    %p56 = scmp.ne.s32.totalorder %s47, %s48
    %p57 = scmp.eq.s32.totalorder %s16, 0
    %p58 = por %p56, %p57
    %p59 = scmp.ne.s32.totalorder %s47, %s48
    %p60 = scmp.eq.s32.totalorder %s17, 1
    %p61 = por %p59, %p60
    %p63 = scmp.ne.s32.totalorder %s48, %s62
    %p64 = scmp.eq.s32.totalorder %s17, 0
    %p65 = por %p63, %p64
    %s67 = sadd.s32 %s66, 1
    %p70 = scmp.eq.s32.totalorder %s11, 1
    %p71 = scmp.ne.s32.totalorder %s66, %s68
    %p72 = scmp.eq.s32.totalorder %s11, 0
    %p73 = por %p71, %p72
    %p74 = scmp.ne.s32.totalorder %s66, %s68
    %p75 = scmp.eq.s32.totalorder %s16, 1
    %p76 = por %p74, %p75
    %p77 = scmp.ne.s32.totalorder %s68, %s69
    %p78 = scmp.eq.s32.totalorder %s16, 0
    %p79 = por %p77, %p78
    %p80 = scmp.ne.s32.totalorder %s68, %s69
    %p81 = scmp.eq.s32.totalorder %s17, 1
    %p82 = por %p80, %p81
    %p84 = scmp.ne.s32.totalorder %s69, %s83
    %p85 = scmp.eq.s32.totalorder %s17, 0
    %p86 = por %p84, %p85
    %s88 = sadd.s32 %s87, 1
    %p91 = scmp.eq.s32.totalorder %s11, 1
    %p92 = scmp.ne.s32.totalorder %s87, %s89
    %p93 = scmp.eq.s32.totalorder %s11, 0
    %p94 = por %p92, %p93
    %p95 = scmp.ne.s32.totalorder %s87, %s89
    %p96 = scmp.eq.s32.totalorder %s16, 1
    %p97 = por %p95, %p96
    %p98 = scmp.ne.s32.totalorder %s89, %s90
    %p99 = scmp.eq.s32.totalorder %s16, 0
    %p100 = por %p98, %p99
    %p101 = scmp.ne.s32.totalorder %s89, %s90
    %p102 = scmp.eq.s32.totalorder %s17, 1
    %p103 = por %p101, %p102
    %p105 = scmp.ne.s32.totalorder %s90, %s104
    %p106 = scmp.eq.s32.totalorder %s17, 0
    %p107 = por %p105, %p106
    %s109 = sadd.s32 %s108, 1
    %p112 = scmp.eq.s32.totalorder %s11, 1
    %p113 = scmp.ne.s32.totalorder %s108, %s110
    %p114 = scmp.eq.s32.totalorder %s11, 0
    %p115 = por %p113, %p114
    %p116 = scmp.ne.s32.totalorder %s108, %s110
    %p117 = scmp.eq.s32.totalorder %s16, 1
    %p118 = por %p116, %p117
    %p119 = scmp.ne.s32.totalorder %s110, %s111
    %p120 = scmp.eq.s32.totalorder %s16, 0
    %p121 = por %p119, %p120
    %p122 = scmp.ne.s32.totalorder %s110, %s111
    %p123 = scmp.eq.s32.totalorder %s17, 1
    %p124 = por %p122, %p123
    %p126 = scmp.ne.s32.totalorder %s111, %s125
    %p127 = scmp.eq.s32.totalorder %s17, 0
    %p128 = por %p126, %p127
    %s129 = ssub.s32 %s11, %s18
    %p130 = scmp.eq.s32.totalorder %s129, 0
    %s132 = sadd.s32 %s131, 1
    %s133 = scalar_select %p130, %s131, %s132
    %p136 = pneg %p130
    %p137 = scmp.eq.s32.totalorder %s11, 1
    %p138 = por %p136, %p137
    %p139 = scmp.ne.s32.totalorder %s131, %s134
    %p140 = scmp.eq.s32.totalorder %s11, 0
    %p141 = por %p139, %p140
    %p142 = scmp.ne.s32.totalorder %s131, %s134
    %p143 = scmp.eq.s32.totalorder %s16, 1
    %p144 = por %p142, %p143
    %p145 = scmp.ne.s32.totalorder %s134, %s135
    %p146 = scmp.eq.s32.totalorder %s16, 0
    %p147 = por %p145, %p146
    %p148 = scmp.ne.s32.totalorder %s134, %s135
    %p149 = scmp.eq.s32.totalorder %s17, 1
    %p150 = por %p148, %p149
    %p152 = scmp.ne.s32.totalorder %s135, %s151
    %p153 = scmp.eq.s32.totalorder %s17, 0
    %p154 = por %p152, %p153
    %p155 = scmp.le.s32.totalorder 1, %s11
    %p156 = scmp.lt.s32.totalorder %s11, 3
    %p157 = pnand %p155, %p156
    %p158 = pneg %p157
    // Predicated region
    $region9: #{resblock2_forward.1} parent=5 // pred_check
      _
    $region10: #{resblock2_forward.1} parent=5 // pred_check_branch
      %160 = sbr.rel (%p157) target = $region12
    $region11: #{resblock2_forward.1} parent=5 // pred_region
      %s161 = ssub.s32 %s11, 1
      // Predicated region
      $region13: #{resblock2_forward.1} parent=11 // pred_check
        %p162 = pneg %p58
      $region14: #{resblock2_forward.1} parent=11 // pred_check_branch
        %164 = sbr.rel (%p162) target = $region16
      $region15: #{resblock2_forward.1} parent=11 // pred_region
        _
      $region16: #{resblock2_forward.1} parent=11 // pred_fallthru
        _
      // Predicated region
      $region17: #{resblock2_forward.1} parent=11 // pred_check
        %p165 = pneg %p79
      $region18: #{resblock2_forward.1} parent=11 // pred_check_branch
        %167 = sbr.rel (%p165) target = $region20
      $region19: #{resblock2_forward.1} parent=11 // pred_region
        _
      $region20: #{resblock2_forward.1} parent=11 // pred_fallthru
        _
      // Predicated region
      $region21: #{resblock2_forward.1} parent=11 // pred_check
        %p168 = pneg %p100
      $region22: #{resblock2_forward.1} parent=11 // pred_check_branch
        %170 = sbr.rel (%p168) target = $region24
      $region23: #{resblock2_forward.1} parent=11 // pred_region
        _
      $region24: #{resblock2_forward.1} parent=11 // pred_fallthru
        _
      // Predicated region
      $region25: #{resblock2_forward.1} parent=11 // pred_check
        %p171 = pneg %p121
      $region26: #{resblock2_forward.1} parent=11 // pred_check_branch
        %173 = sbr.rel (%p171) target = $region28
      $region27: #{resblock2_forward.1} parent=11 // pred_region
        _
      $region28: #{resblock2_forward.1} parent=11 // pred_fallthru
        _
    $region12: #{resblock2_forward.1} parent=5 // pred_fallthru
      _
    %p174 = scmp.lt.s32.totalorder %s11, 2
    // Predicated region
    $region29: #{resblock2_forward.1} parent=5 // pred_check
      %p175 = pneg %p174
    $region30: #{resblock2_forward.1} parent=5 // pred_check_branch
      %177 = sbr.rel (%p175) target = $region32
    $region31: #{resblock2_forward.1} parent=5 // pred_region
      // Predicated region
      $region33: #{resblock2_forward.1} parent=31 // pred_check
        %p178 = pneg %p31
      $region34: #{resblock2_forward.1} parent=31 // pred_check_branch
        %180 = sbr.rel (%p178) target = $region36
      $region35: #{resblock2_forward.1} parent=31 // pred_region
        %p181 = scmp.lt.s32.totalorder %s11, 1
        %s182 = scalar_select %p181, %s11, 1
        %s183 = smul.addr %s182, 16
        %s184 = smul.addr %s183, 8
        %s185 = scalar_lea.vmem %s0, %s184
      $region36: #{resblock2_forward.1} parent=31 // pred_fallthru
        _
    $region32: #{resblock2_forward.1} parent=5 // pred_fallthru
      _
    %p186 = scmp.le.s32.totalorder 1, %s11
    %p187 = scmp.lt.s32.totalorder %s11, 3
    %p188 = pnand %p186, %p187
    %p189 = pneg %p188
    // Predicated region
    $region37: #{resblock2_forward.1} parent=5 // pred_check
      _
    $region38: #{resblock2_forward.1} parent=5 // pred_check_branch
      %191 = sbr.rel (%p188) target = $region40
    $region39: #{resblock2_forward.1} parent=5 // pred_region
      %s192 = ssub.s32 %s11, 1
      %p193 = scmp.lt.s32.totalorder %s16, 1
      %s194 = scalar_select %p193, %s16, 1
      %s195 = smul.addr %s194, 16
      %s196 = smul.addr %s195, 8
      %s197 = scalar_lea.vmem %s0, %s196
      %p198 = pneg %p37
      %p199 = pneg %p34
      %p200 = pneg %p58
      %p201 = pneg %p55
      %p202 = pneg %p79
      %p203 = pneg %p76
      %p204 = pneg %p100
      %p205 = pneg %p97
      %p206 = pneg %p121
      %p207 = pneg %p118
      %p208 = pneg %p147
      %p209 = pneg %p144
      %p210 = scmp.lt.s32.totalorder %s16, 1
      %s211 = scalar_select %p210, %s16, 1
      %s212 = smul.addr %s211, 16
      %s213 = smul.addr %s212, 8
      %s214 = scalar_lea.vmem %s5, %s213
      %p215 = scmp.lt.s32.totalorder %s16, 1
      %s216 = scalar_select %p215, %s16, 1
      %s217 = smul.addr %s216, 16
      %s218 = smul.addr %s217, 8
      %s219 = scalar_lea.vmem %s0, %s218
      %p220 = scmp.lt.s32.totalorder %s16, 1
      %s221 = scalar_select %p220, %s16, 1
      %s222 = smul.addr %s221, 16
      %s223 = smul.addr %s222, 8
      %s224 = scalar_lea.vmem %s5, %s223
      %226 = vst [vmem:[#allocation2] sm:$0xff] 0
      %227 = vst [vmem:[#allocation2 + $0x48] sm:$0xff] 0
      %v228 = vld [vmem:[%s219] sm:$0xff]
      %v229 = vld [vmem:[%s219 + $0x8] sm:$0xff]
      %v230 = vld [vmem:[%s219 + $0x10] sm:$0xff]
      %v231 = vld [vmem:[%s219 + $0x18] sm:$0xff]
      %v232 = vld [vmem:[%s219 + $0x20] sm:$0xff]
      %v233 = vld [vmem:[%s219 + $0x28] sm:$0xff]
      %v234 = vld [vmem:[%s219 + $0x30] sm:$0xff]
      %v235 = vld [vmem:[%s219 + $0x38] sm:$0xff]
      %v236 = vld [vmem:[%s219 + $0x40] sm:$0xff]
      %v237 = vld [vmem:[%s219 + $0x48] sm:$0xff]
      %v238 = vld [vmem:[%s219 + $0x50] sm:$0xff]
      %v239 = vld [vmem:[%s219 + $0x58] sm:$0xff]
      %v240 = vld [vmem:[%s219 + $0x60] sm:$0xff]
      %v241 = vld [vmem:[%s219 + $0x68] sm:$0xff]
      %v242 = vld [vmem:[%s219 + $0x70] sm:$0xff]
      %v243 = vld [vmem:[%s219 + $0x78] sm:$0xff]
      %v244 = vmul.f32 %v228, 0.1
      %v245 = vmul.f32 %v229, 0.1
      %v246 = vmul.f32 %v230, 0.1
      %v247 = vmul.f32 %v231, 0.1
      %v248 = vmul.f32 %v232, 0.1
      %v249 = vmul.f32 %v233, 0.1
      %v250 = vmul.f32 %v234, 0.1
      %v251 = vmul.f32 %v235, 0.1
      %v252 = vmul.f32 %v236, 0.1
      %v253 = vmul.f32 %v237, 0.1
      %v254 = vmul.f32 %v238, 0.1
      %v255 = vmul.f32 %v239, 0.1
      %v256 = vmul.f32 %v240, 0.1
      %v257 = vmul.f32 %v241, 0.1
      %v258 = vmul.f32 %v242, 0.1
      %v259 = vmul.f32 %v243, 0.1
      %v260 = vmax.f32 %v228, %v244
      %v261 = vmax.f32 %v229, %v245
      %v262 = vmax.f32 %v230, %v246
      %v263 = vmax.f32 %v231, %v247
      %v264 = vmax.f32 %v232, %v248
      %v265 = vmax.f32 %v233, %v249
      %v266 = vmax.f32 %v234, %v250
      %v267 = vmax.f32 %v235, %v251
      %v268 = vmax.f32 %v236, %v252
      %v269 = vmax.f32 %v237, %v253
      %v270 = vmax.f32 %v238, %v254
      %v271 = vmax.f32 %v239, %v255
      %v272 = vmax.f32 %v240, %v256
      %v273 = vmax.f32 %v241, %v257
      %v274 = vmax.f32 %v242, %v258
      %v275 = vmax.f32 %v243, %v259
      %v276 = vpack.c.bf16 %v261, %v260
      %v277 = vpack.c.bf16 %v263, %v262
      %v278 = vpack.c.bf16 %v265, %v264
      %v279 = vpack.c.bf16 %v267, %v266
      %v280 = vpack.c.bf16 %v269, %v268
      %v281 = vpack.c.bf16 %v271, %v270
      %v282 = vpack.c.bf16 %v273, %v272
      %v283 = vpack.c.bf16 %v275, %v274
      %284 = vst [vmem:[#allocation2 + $0x8] sm:$0xff] %v276
      %285 = vst [vmem:[#allocation2 + $0x10] sm:$0xff] %v277
      %286 = vst [vmem:[#allocation2 + $0x18] sm:$0xff] %v278
      %287 = vst [vmem:[#allocation2 + $0x20] sm:$0xff] %v279
      %288 = vst [vmem:[#allocation2 + $0x28] sm:$0xff] %v280
      %289 = vst [vmem:[#allocation2 + $0x30] sm:$0xff] %v281
      %290 = vst [vmem:[#allocation2 + $0x38] sm:$0xff] %v282
      %291 = vst [vmem:[#allocation2 + $0x40] sm:$0xff] %v283
      %v292 = vld [vmem:[#allocation2] sm:$0x80]
      %v293 = vld [vmem:[#allocation2 + $0x8] sm:$0xff]
      %v294 = vld [vmem:[#allocation2 + $0x10] sm:$0xff]
      %v295 = vld [vmem:[#allocation2 + $0x18] sm:$0xff]
      %v296 = vld [vmem:[#allocation2 + $0x20] sm:$0xff]
      %v297 = vld [vmem:[#allocation2 + $0x28] sm:$0xff]
      %v298 = vld [vmem:[#allocation2 + $0x30] sm:$0xff]
      %v299 = vld [vmem:[#allocation2 + $0x38] sm:$0xff]
      %v300 = vld [vmem:[#allocation2 + $0x40] sm:$0xff]
      %v301 = vld [vmem:[#allocation2 + $0x8] sm:$0xff]
      %v302 = vld [vmem:[#allocation2 + $0x10] sm:$0xff]
      %v303 = vld [vmem:[#allocation2 + $0x18] sm:$0xff]
      %v304 = vld [vmem:[#allocation2 + $0x20] sm:$0xff]
      %v305 = vld [vmem:[#allocation2 + $0x28] sm:$0xff]
      %v306 = vld [vmem:[#allocation2 + $0x30] sm:$0xff]
      %v307 = vld [vmem:[#allocation2 + $0x38] sm:$0xff]
      %v308 = vld [vmem:[#allocation2 + $0x40] sm:$0xff]
      %v309 = vld [vmem:[#allocation2 + $0x48] sm:$0x1]
      %v310 = vld [vmem:[%s1] sm:$0xf]
      %v311 = vld [vmem:[%s1 + $0x4] sm:$0xf]
      %v312 = vld [vmem:[%s1 + $0x8] sm:$0xf]
      %v313 = vld [vmem:[%s1 + $0xc] sm:$0xf]
      %v314 = vld [vmem:[%s1 + $0x10] sm:$0xf]
      %v315 = vld [vmem:[%s1 + $0x14] sm:$0xf]
      %v316 = vld [vmem:[%s1 + $0x18] sm:$0xf]
      %v317 = vld [vmem:[%s1 + $0x1c] sm:$0xf]
      %v318 = vld [vmem:[%s1 + $0x20] sm:$0xf]
      %v319 = vld [vmem:[%s1 + $0x24] sm:$0xf]
      %v320 = vld [vmem:[%s1 + $0x28] sm:$0xf]
      %v321 = vld [vmem:[%s1 + $0x2c] sm:$0xf]
      %v322 = vld [vmem:[%s1 + $0x30] sm:$0xf]
      %v323 = vld [vmem:[%s1 + $0x34] sm:$0xf]
      %v324 = vld [vmem:[%s1 + $0x38] sm:$0xf]
      %v325 = vld [vmem:[%s1 + $0x3c] sm:$0xf]
      %s326 = scalar_lea.vmem %s1, 64
      %v327 = vld [vmem:[%s326] sm:$0xf]
      %v328 = vld [vmem:[%s326 + $0x4] sm:$0xf]
      %v329 = vld [vmem:[%s326 + $0x8] sm:$0xf]
      %v330 = vld [vmem:[%s326 + $0xc] sm:$0xf]
      %v331 = vld [vmem:[%s326 + $0x10] sm:$0xf]
      %v332 = vld [vmem:[%s326 + $0x14] sm:$0xf]
      %v333 = vld [vmem:[%s326 + $0x18] sm:$0xf]
      %v334 = vld [vmem:[%s326 + $0x1c] sm:$0xf]
      %v335 = vld [vmem:[%s326 + $0x20] sm:$0xf]
      %v336 = vld [vmem:[%s326 + $0x24] sm:$0xf]
      %v337 = vld [vmem:[%s326 + $0x28] sm:$0xf]
      %v338 = vld [vmem:[%s326 + $0x2c] sm:$0xf]
      %v339 = vld [vmem:[%s326 + $0x30] sm:$0xf]
      %v340 = vld [vmem:[%s326 + $0x34] sm:$0xf]
      %v341 = vld [vmem:[%s326 + $0x38] sm:$0xf]
      %v342 = vld [vmem:[%s326 + $0x3c] sm:$0xf]
      %v359 = vunpack.c.l.b16 %v327
      %v360 = vunpack.c.l.b16 %v328
      %v361 = vunpack.c.l.b16 %v329
      %v362 = vunpack.c.l.b16 %v330
      %v363 = vunpack.c.l.b16 %v331
      %v364 = vunpack.c.l.b16 %v332
      %v365 = vunpack.c.l.b16 %v333
      %v366 = vunpack.c.l.b16 %v334
      %v367 = vunpack.c.l.b16 %v335
      %v368 = vunpack.c.l.b16 %v336
      %v369 = vunpack.c.l.b16 %v337
      %v370 = vunpack.c.l.b16 %v338
      %v371 = vunpack.c.l.b16 %v339
      %v372 = vunpack.c.l.b16 %v340
      %v373 = vunpack.c.l.b16 %v341
      %v374 = vunpack.c.l.b16 %v342
      %v375 = vpack.c.b16 %v360, %v359
      %v376 = vpack.c.b16 %v362, %v361
      %v377 = vpack.c.b16 %v364, %v363
      %v378 = vpack.c.b16 %v366, %v365
      %v379 = vpack.c.b16 %v368, %v367
      %v380 = vpack.c.b16 %v370, %v369
      %v381 = vpack.c.b16 %v372, %v371
      %v382 = vpack.c.b16 %v374, %v373
      %391 = vmatprep.subr.bf16.mxu0 0
      %392 = vmatpush1.bf16.msra.mxu0 %v375
      %393 = vmatprep.subr.bf16.mxu0 0
      %394 = vmatpush1.bf16.msra.mxu0 %v376
      %395 = vmatprep.subr.bf16.mxu0 0
      %396 = vmatpush1.bf16.msra.mxu0 %v377
      %397 = vmatprep.subr.bf16.mxu0 0
      %398 = vmatpush1.bf16.msra.mxu0 %v378
      %399 = vmatprep.subr.bf16.mxu0 0
      %400 = vmatpush1.bf16.msra.mxu0 %v379
      %401 = vmatprep.subr.bf16.mxu0 0
      %402 = vmatpush1.bf16.msra.mxu0 %v380
      %403 = vmatprep.subr.bf16.mxu0 0
      %404 = vmatpush1.bf16.msra.mxu0 %v381
      %405 = vmatprep.subr.bf16.mxu0 0
      %406 = vmatpush1.bf16.msra.mxu0 %v382
      %407 = vmatprep.subr.bf16.mxu0 0
      %408 = vmatpush1.bf16.msra.mxu0 0
      %409 = vmatprep.subr.bf16.mxu0 0
      %410 = vmatpush1.bf16.msra.mxu0 0
      %411 = vmatprep.subr.bf16.mxu0 0
      %412 = vmatpush1.bf16.msra.mxu0 0
      %413 = vmatprep.subr.bf16.mxu0 0
      %414 = vmatpush1.bf16.msra.mxu0 0
      %415 = vmatprep.subr.bf16.mxu0 0
      %416 = vmatpush1.bf16.msra.mxu0 0
      %417 = vmatprep.subr.bf16.mxu0 0
      %418 = vmatpush1.bf16.msra.mxu0 0
      %419 = vmatprep.subr.bf16.mxu0 0
      %420 = vmatpush1.bf16.msra.mxu0 0
      %421 = vmatprep.subr.bf16.mxu0 0
      %422 = vmatpush1.bf16.msra.mxu0 0
      %423 = vmatprep.mubr.bf16.mxu0 0
      %424 = vmatmul.mubr.bf16.gmra.mrb[0].mxu0 %v276
      %v425 = vpop.f32.mrb[0].mxu0
      %v426 = vadd.f32 0.0, %v425
      %v427 = vpop.f32.mrb[0].mxu0
      %v428 = vpop.f32.mrb[0].mxu0
      %v429 = vadd.f32 0.0, %v428
      %v430 = vpop.f32.mrb[0].mxu0
      %431 = vmatprep.mubr.bf16.mxu0 0
      %432 = vmatmul.mubr.bf16.gmra.mrb[0].mxu0 %v277
      %v433 = vpop.f32.mrb[0].mxu0
      %v434 = vadd.f32 0.0, %v433
      %v435 = vpop.f32.mrb[0].mxu0
      %v436 = vpop.f32.mrb[0].mxu0
      %v437 = vadd.f32 0.0, %v436
      %v438 = vpop.f32.mrb[0].mxu0
      %439 = vmatprep.mubr.bf16.mxu0 0
      %440 = vmatmul.mubr.bf16.gmra.mrb[0].mxu0 %v278
      %v441 = vpop.f32.mrb[0].mxu0
      %v442 = vadd.f32 0.0, %v441
      %v443 = vpop.f32.mrb[0].mxu0
      %v444 = vpop.f32.mrb[0].mxu0
      %v445 = vadd.f32 0.0, %v444
      %v446 = vpop.f32.mrb[0].mxu0
      %447 = vmatprep.mubr.bf16.mxu0 0
      %448 = vmatmul.mubr.bf16.gmra.mrb[0].mxu0 %v279
      %v449 = vpop.f32.mrb[0].mxu0
      %v450 = vadd.f32 0.0, %v449
      %v451 = vpop.f32.mrb[0].mxu0
      %v452 = vpop.f32.mrb[0].mxu0
      %v453 = vadd.f32 0.0, %v452
      %v454 = vpop.f32.mrb[0].mxu0
      %455 = vmatprep.mubr.bf16.mxu0 0
      %456 = vmatmul.mubr.bf16.gmra.mrb[0].mxu0 %v280
      %v457 = vpop.f32.mrb[0].mxu0
      %v458 = vadd.f32 0.0, %v457
      %v459 = vpop.f32.mrb[0].mxu0
      %v460 = vpop.f32.mrb[0].mxu0
      %v461 = vadd.f32 0.0, %v460
      %v462 = vpop.f32.mrb[0].mxu0
      %463 = vmatprep.mubr.bf16.mxu0 0
      %464 = vmatmul.mubr.bf16.gmra.mrb[0].mxu0 %v281
      %v465 = vpop.f32.mrb[0].mxu0
      %v466 = vadd.f32 0.0, %v465
      %v467 = vpop.f32.mrb[0].mxu0
      %v468 = vpop.f32.mrb[0].mxu0
      %v469 = vadd.f32 0.0, %v468
      %v470 = vpop.f32.mrb[0].mxu0
      %471 = vmatprep.mubr.bf16.mxu0 0
      %472 = vmatmul.mubr.bf16.gmra.mrb[0].mxu0 %v282
      %v473 = vpop.f32.mrb[0].mxu0
      %v474 = vadd.f32 0.0, %v473
      %v475 = vpop.f32.mrb[0].mxu0
      %v476 = vpop.f32.mrb[0].mxu0
      %v477 = vadd.f32 0.0, %v476
      %v478 = vpop.f32.mrb[0].mxu0
      %479 = vmatprep.mubr.bf16.mxu0 0
      %480 = vmatmul.mubr.bf16.gmra.mrb[0].mxu0 %v283
      %v481 = vpop.f32.mrb[0].mxu0
      %v482 = vadd.f32 0.0, %v481
      %v483 = vpop.f32.mrb[0].mxu0
      %v484 = vpop.f32.mrb[0].mxu0
      %v485 = vadd.f32 0.0, %v484
      %v486 = vpop.f32.mrb[0].mxu0
      %487 = vdwg.mxu0
      %vm488 = vsmask.f32 256
      %v490 = vshrl.u32 %v292, 16
      %v492 = vrot.slane %v490, 7
      %v494 = vshrl.u32 %v293, 16
      %v496 = vrot.slane %v494, 7
      %v497 = vshll.u32 %v293, 16
      %v499 = vor.u32 %v496, %v497
      %v500 = vsel %vm488, %v492, %v499
      %v502 = vshrl.u32 %v294, 16
      %v504 = vrot.slane %v502, 7
      %v505 = vshll.u32 %v294, 16
      %v507 = vor.u32 %v504, %v505
      %v508 = vsel %vm488, %v496, %v507
      %v510 = vshrl.u32 %v295, 16
      %v512 = vrot.slane %v510, 7
      %v513 = vshll.u32 %v295, 16
      %v515 = vor.u32 %v512, %v513
      %v516 = vsel %vm488, %v504, %v515
      %v518 = vshrl.u32 %v296, 16
      %v520 = vrot.slane %v518, 7
      %v521 = vshll.u32 %v296, 16
      %v523 = vor.u32 %v520, %v521
      %v524 = vsel %vm488, %v512, %v523
      %v526 = vshrl.u32 %v297, 16
      %v528 = vrot.slane %v526, 7
      %v529 = vshll.u32 %v297, 16
      %v531 = vor.u32 %v528, %v529
      %v532 = vsel %vm488, %v520, %v531
      %v534 = vshrl.u32 %v298, 16
      %v536 = vrot.slane %v534, 7
      %v537 = vshll.u32 %v298, 16
      %v539 = vor.u32 %v536, %v537
      %v540 = vsel %vm488, %v528, %v539
      %v542 = vshrl.u32 %v299, 16
      %v544 = vrot.slane %v542, 7
      %v545 = vshll.u32 %v299, 16
      %v547 = vor.u32 %v544, %v545
      %v548 = vsel %vm488, %v536, %v547
      %v550 = vshrl.u32 %v300, 16
      %v552 = vrot.slane %v550, 7
      %v553 = vshll.u32 %v300, 16
      %v555 = vor.u32 %v552, %v553
      %v556 = vsel %vm488, %v544, %v555
      %v581 = vunpack.c.l.b16 %v310
      %v582 = vunpack.c.l.b16 %v311
      %v583 = vunpack.c.l.b16 %v312
      %v584 = vunpack.c.l.b16 %v313
      %v585 = vunpack.c.l.b16 %v314
      %v586 = vunpack.c.l.b16 %v315
      %v587 = vunpack.c.l.b16 %v316
      %v588 = vunpack.c.l.b16 %v317
      %v589 = vunpack.c.l.b16 %v318
      %v590 = vunpack.c.l.b16 %v319
      %v591 = vunpack.c.l.b16 %v320
      %v592 = vunpack.c.l.b16 %v321
      %v593 = vunpack.c.l.b16 %v322
      %v594 = vunpack.c.l.b16 %v323
      %v595 = vunpack.c.l.b16 %v324
      %v596 = vunpack.c.l.b16 %v325
      %v597 = vpack.c.b16 %v582, %v581
      %v598 = vpack.c.b16 %v584, %v583
      %v599 = vpack.c.b16 %v586, %v585
      %v600 = vpack.c.b16 %v588, %v587
      %v601 = vpack.c.b16 %v590, %v589
      %v602 = vpack.c.b16 %v592, %v591
      %v603 = vpack.c.b16 %v594, %v593
      %v604 = vpack.c.b16 %v596, %v595
      %613 = vmatprep.subr.bf16.mxu0 0
      %614 = vmatpush1.bf16.msra.mxu0 %v597
      %615 = vmatprep.subr.bf16.mxu0 0
      %616 = vmatpush1.bf16.msra.mxu0 %v598
      %617 = vmatprep.subr.bf16.mxu0 0
      %618 = vmatpush1.bf16.msra.mxu0 %v599
      %619 = vmatprep.subr.bf16.mxu0 0
      %620 = vmatpush1.bf16.msra.mxu0 %v600
      %621 = vmatprep.subr.bf16.mxu0 0
      %622 = vmatpush1.bf16.msra.mxu0 %v601
      %623 = vmatprep.subr.bf16.mxu0 0
      %624 = vmatpush1.bf16.msra.mxu0 %v602
      %625 = vmatprep.subr.bf16.mxu0 0
      %626 = vmatpush1.bf16.msra.mxu0 %v603
      %627 = vmatprep.subr.bf16.mxu0 0
      %628 = vmatpush1.bf16.msra.mxu0 %v604
      %629 = vmatprep.subr.bf16.mxu0 0
      %630 = vmatpush1.bf16.msra.mxu0 0
      %631 = vmatprep.subr.bf16.mxu0 0
      %632 = vmatpush1.bf16.msra.mxu0 0
      %633 = vmatprep.subr.bf16.mxu0 0
      %634 = vmatpush1.bf16.msra.mxu0 0
      %635 = vmatprep.subr.bf16.mxu0 0
      %636 = vmatpush1.bf16.msra.mxu0 0
      %637 = vmatprep.subr.bf16.mxu0 0
      %638 = vmatpush1.bf16.msra.mxu0 0
      %639 = vmatprep.subr.bf16.mxu0 0
      %640 = vmatpush1.bf16.msra.mxu0 0
      %641 = vmatprep.subr.bf16.mxu0 0
      %642 = vmatpush1.bf16.msra.mxu0 0
      %643 = vmatprep.subr.bf16.mxu0 0
      %644 = vmatpush1.bf16.msra.mxu0 0
      %645 = vmatprep.mubr.bf16.mxu0 0
      %646 = vmatmul.mubr.bf16.gmra.mrb[0].mxu0 %v500
      %v647 = vpop.f32.mrb[0].mxu0
      %v648 = vadd.f32 %v426, %v647
      %v649 = vpop.f32.mrb[0].mxu0
      %v650 = vpop.f32.mrb[0].mxu0
      %v651 = vadd.f32 %v429, %v650
      %v652 = vpop.f32.mrb[0].mxu0
      %653 = vmatprep.mubr.bf16.mxu0 0
      %654 = vmatmul.mubr.bf16.gmra.mrb[0].mxu0 %v508
      %v655 = vpop.f32.mrb[0].mxu0
      %v656 = vadd.f32 %v434, %v655
      %v657 = vpop.f32.mrb[0].mxu0
      %v658 = vpop.f32.mrb[0].mxu0
      %v659 = vadd.f32 %v437, %v658
      %v660 = vpop.f32.mrb[0].mxu0
      %661 = vmatprep.mubr.bf16.mxu0 0
      %662 = vmatmul.mubr.bf16.gmra.mrb[0].mxu0 %v516
      %v663 = vpop.f32.mrb[0].mxu0
      %v664 = vadd.f32 %v442, %v663
      %v665 = vpop.f32.mrb[0].mxu0
      %v666 = vpop.f32.mrb[0].mxu0
      %v667 = vadd.f32 %v445, %v666
      %v668 = vpop.f32.mrb[0].mxu0
      %669 = vmatprep.mubr.bf16.mxu0 0
      %670 = vmatmul.mubr.bf16.gmra.mrb[0].mxu0 %v524
      %v671 = vpop.f32.mrb[0].mxu0
      %v672 = vadd.f32 %v450, %v671
      %v673 = vpop.f32.mrb[0].mxu0
      %v674 = vpop.f32.mrb[0].mxu0
      %v675 = vadd.f32 %v453, %v674
      %v676 = vpop.f32.mrb[0].mxu0
      %677 = vmatprep.mubr.bf16.mxu0 0
      %678 = vmatmul.mubr.bf16.gmra.mrb[0].mxu0 %v532
      %v679 = vpop.f32.mrb[0].mxu0
      %v680 = vadd.f32 %v458, %v679
      %v681 = vpop.f32.mrb[0].mxu0
      %v682 = vpop.f32.mrb[0].mxu0
      %v683 = vadd.f32 %v461, %v682
      %v684 = vpop.f32.mrb[0].mxu0
      %685 = vmatprep.mubr.bf16.mxu0 0
      %686 = vmatmul.mubr.bf16.gmra.mrb[0].mxu0 %v540
      %v687 = vpop.f32.mrb[0].mxu0
      %v688 = vadd.f32 %v466, %v687
      %v689 = vpop.f32.mrb[0].mxu0
      %v690 = vpop.f32.mrb[0].mxu0
      %v691 = vadd.f32 %v469, %v690
      %v692 = vpop.f32.mrb[0].mxu0
      %693 = vmatprep.mubr.bf16.mxu0 0
      %694 = vmatmul.mubr.bf16.gmra.mrb[0].mxu0 %v548
      %v695 = vpop.f32.mrb[0].mxu0
      %v696 = vadd.f32 %v474, %v695
      %v697 = vpop.f32.mrb[0].mxu0
      %v698 = vpop.f32.mrb[0].mxu0
      %v699 = vadd.f32 %v477, %v698
      %v700 = vpop.f32.mrb[0].mxu0
      %701 = vmatprep.mubr.bf16.mxu0 0
      %702 = vmatmul.mubr.bf16.gmra.mrb[0].mxu0 %v556
      %v703 = vpop.f32.mrb[0].mxu0
      %v704 = vadd.f32 %v482, %v703
      %v705 = vpop.f32.mrb[0].mxu0
      %v706 = vpop.f32.mrb[0].mxu0
      %v707 = vadd.f32 %v485, %v706
      %v708 = vpop.f32.mrb[0].mxu0
      %709 = vdwg.mxu0
      %s710 = scalar_lea.vmem %s1, 128
      %v711 = vld [vmem:[%s710] sm:$0xf]
      %v712 = vld [vmem:[%s710 + $0x4] sm:$0xf]
      %v713 = vld [vmem:[%s710 + $0x8] sm:$0xf]
      %v714 = vld [vmem:[%s710 + $0xc] sm:$0xf]
      %v715 = vld [vmem:[%s710 + $0x10] sm:$0xf]
      %v716 = vld [vmem:[%s710 + $0x14] sm:$0xf]
      %v717 = vld [vmem:[%s710 + $0x18] sm:$0xf]
      %v718 = vld [vmem:[%s710 + $0x1c] sm:$0xf]
      %v719 = vld [vmem:[%s710 + $0x20] sm:$0xf]
      %v720 = vld [vmem:[%s710 + $0x24] sm:$0xf]
      %v721 = vld [vmem:[%s710 + $0x28] sm:$0xf]
      %v722 = vld [vmem:[%s710 + $0x2c] sm:$0xf]
      %v723 = vld [vmem:[%s710 + $0x30] sm:$0xf]
      %v724 = vld [vmem:[%s710 + $0x34] sm:$0xf]
      %v725 = vld [vmem:[%s710 + $0x38] sm:$0xf]
      %v726 = vld [vmem:[%s710 + $0x3c] sm:$0xf]
      %vm727 = vsmask.f32 7424
      %v729 = vshrl.u32 %v301, 16
      %v731 = vshll.u32 %v301, 16
      %v733 = vrot.slane %v731, 1
      %v734 = vor.u32 %v729, %v733
      %v736 = vshll.u32 %v302, 16
      %v738 = vrot.slane %v736, 1
      %v739 = vsel %vm727, %v734, %v738
      %v740 = vshrl.u32 %v302, 16
      %v742 = vor.u32 %v740, %v738
      %v744 = vshll.u32 %v303, 16
      %v746 = vrot.slane %v744, 1
      %v747 = vsel %vm727, %v742, %v746
      %v748 = vshrl.u32 %v303, 16
      %v750 = vor.u32 %v748, %v746
      %v752 = vshll.u32 %v304, 16
      %v754 = vrot.slane %v752, 1
      %v755 = vsel %vm727, %v750, %v754
      %v756 = vshrl.u32 %v304, 16
      %v758 = vor.u32 %v756, %v754
      %v760 = vshll.u32 %v305, 16
      %v762 = vrot.slane %v760, 1
      %v763 = vsel %vm727, %v758, %v762
      %v764 = vshrl.u32 %v305, 16
      %v766 = vor.u32 %v764, %v762
      %v768 = vshll.u32 %v306, 16
      %v770 = vrot.slane %v768, 1
      %v771 = vsel %vm727, %v766, %v770
      %v772 = vshrl.u32 %v306, 16
      %v774 = vor.u32 %v772, %v770
      %v776 = vshll.u32 %v307, 16
      %v778 = vrot.slane %v776, 1
      %v779 = vsel %vm727, %v774, %v778
      %v780 = vshrl.u32 %v307, 16
      %v782 = vor.u32 %v780, %v778
      %v784 = vshll.u32 %v308, 16
      %v786 = vrot.slane %v784, 1
      %v787 = vsel %vm727, %v782, %v786
      %v788 = vshrl.u32 %v308, 16
      %v790 = vor.u32 %v788, %v786
      %v792 = vshll.u32 %v309, 16
      %v794 = vrot.slane %v792, 1
      %v795 = vsel %vm727, %v790, %v794
      %v820 = vunpack.c.l.b16 %v711
      %v821 = vunpack.c.l.b16 %v712
      %v822 = vunpack.c.l.b16 %v713
      %v823 = vunpack.c.l.b16 %v714
      %v824 = vunpack.c.l.b16 %v715
      %v825 = vunpack.c.l.b16 %v716
      %v826 = vunpack.c.l.b16 %v717
      %v827 = vunpack.c.l.b16 %v718
      %v828 = vunpack.c.l.b16 %v719
      %v829 = vunpack.c.l.b16 %v720
      %v830 = vunpack.c.l.b16 %v721
      %v831 = vunpack.c.l.b16 %v722
      %v832 = vunpack.c.l.b16 %v723
      %v833 = vunpack.c.l.b16 %v724
      %v834 = vunpack.c.l.b16 %v725
      %v835 = vunpack.c.l.b16 %v726
      %v836 = vpack.c.b16 %v821, %v820
      %v837 = vpack.c.b16 %v823, %v822
      %v838 = vpack.c.b16 %v825, %v824
      %v839 = vpack.c.b16 %v827, %v826
      %v840 = vpack.c.b16 %v829, %v828
      %v841 = vpack.c.b16 %v831, %v830
      %v842 = vpack.c.b16 %v833, %v832
      %v843 = vpack.c.b16 %v835, %v834
      %852 = vmatprep.subr.bf16.mxu0 0
      %853 = vmatpush1.bf16.msra.mxu0 %v836
      %854 = vmatprep.subr.bf16.mxu0 0
      %855 = vmatpush1.bf16.msra.mxu0 %v837
      %856 = vmatprep.subr.bf16.mxu0 0
      %857 = vmatpush1.bf16.msra.mxu0 %v838
      %858 = vmatprep.subr.bf16.mxu0 0
      %859 = vmatpush1.bf16.msra.mxu0 %v839
      %860 = vmatprep.subr.bf16.mxu0 0
      %861 = vmatpush1.bf16.msra.mxu0 %v840
      %862 = vmatprep.subr.bf16.mxu0 0
      %863 = vmatpush1.bf16.msra.mxu0 %v841
      %864 = vmatprep.subr.bf16.mxu0 0
      %865 = vmatpush1.bf16.msra.mxu0 %v842
      %866 = vmatprep.subr.bf16.mxu0 0
      %867 = vmatpush1.bf16.msra.mxu0 %v843
      %868 = vmatprep.subr.bf16.mxu0 0
      %869 = vmatpush1.bf16.msra.mxu0 0
      %870 = vmatprep.subr.bf16.mxu0 0
      %871 = vmatpush1.bf16.msra.mxu0 0
      %872 = vmatprep.subr.bf16.mxu0 0
      %873 = vmatpush1.bf16.msra.mxu0 0
      %874 = vmatprep.subr.bf16.mxu0 0
      %875 = vmatpush1.bf16.msra.mxu0 0
      %876 = vmatprep.subr.bf16.mxu0 0
      %877 = vmatpush1.bf16.msra.mxu0 0
      %878 = vmatprep.subr.bf16.mxu0 0
      %879 = vmatpush1.bf16.msra.mxu0 0
      %880 = vmatprep.subr.bf16.mxu0 0
      %881 = vmatpush1.bf16.msra.mxu0 0
      %882 = vmatprep.subr.bf16.mxu0 0
      %883 = vmatpush1.bf16.msra.mxu0 0
      %884 = vmatprep.mubr.bf16.mxu0 0
      %885 = vmatmul.mubr.bf16.gmra.mrb[0].mxu0 %v739
      %v886 = vpop.f32.mrb[0].mxu0
      %v887 = vadd.f32 0.0, %v886
      %v888 = vpop.f32.mrb[0].mxu0
      %v889 = vpop.f32.mrb[0].mxu0
      %v890 = vadd.f32 0.0, %v889
      %v891 = vpop.f32.mrb[0].mxu0
      %892 = vmatprep.mubr.bf16.mxu0 0
      %893 = vmatmul.mubr.bf16.gmra.mrb[0].mxu0 %v747
      %v894 = vpop.f32.mrb[0].mxu0
      %v895 = vadd.f32 0.0, %v894
      %v896 = vpop.f32.mrb[0].mxu0
      %v897 = vpop.f32.mrb[0].mxu0
      %v898 = vadd.f32 0.0, %v897
      %v899 = vpop.f32.mrb[0].mxu0
      %900 = vmatprep.mubr.bf16.mxu0 0
      %901 = vmatmul.mubr.bf16.gmra.mrb[0].mxu0 %v755
      %v902 = vpop.f32.mrb[0].mxu0
      %v903 = vadd.f32 0.0, %v902
      %v904 = vpop.f32.mrb[0].mxu0
      %v905 = vpop.f32.mrb[0].mxu0
      %v906 = vadd.f32 0.0, %v905
      %v907 = vpop.f32.mrb[0].mxu0
      %908 = vmatprep.mubr.bf16.mxu0 0
      %909 = vmatmul.mubr.bf16.gmra.mrb[0].mxu0 %v763
      %v910 = vpop.f32.mrb[0].mxu0
      %v911 = vadd.f32 0.0, %v910
      %v912 = vpop.f32.mrb[0].mxu0
      %v913 = vpop.f32.mrb[0].mxu0
      %v914 = vadd.f32 0.0, %v913
      %v915 = vpop.f32.mrb[0].mxu0
      %916 = vmatprep.mubr.bf16.mxu0 0
      %917 = vmatmul.mubr.bf16.gmra.mrb[0].mxu0 %v771
      %v918 = vpop.f32.mrb[0].mxu0
      %v919 = vadd.f32 0.0, %v918
      %v920 = vpop.f32.mrb[0].mxu0
      %v921 = vpop.f32.mrb[0].mxu0
      %v922 = vadd.f32 0.0, %v921
      %v923 = vpop.f32.mrb[0].mxu0
      %924 = vmatprep.mubr.bf16.mxu0 0
      %925 = vmatmul.mubr.bf16.gmra.mrb[0].mxu0 %v779
      %v926 = vpop.f32.mrb[0].mxu0
      %v927 = vadd.f32 0.0, %v926
      %v928 = vpop.f32.mrb[0].mxu0
      %v929 = vpop.f32.mrb[0].mxu0
      %v930 = vadd.f32 0.0, %v929
      %v931 = vpop.f32.mrb[0].mxu0
      %932 = vmatprep.mubr.bf16.mxu0 0
      %933 = vmatmul.mubr.bf16.gmra.mrb[0].mxu0 %v787
      %v934 = vpop.f32.mrb[0].mxu0
      %v935 = vadd.f32 0.0, %v934
      %v936 = vpop.f32.mrb[0].mxu0
      %v937 = vpop.f32.mrb[0].mxu0
      %v938 = vadd.f32 0.0, %v937
      %v939 = vpop.f32.mrb[0].mxu0
      %940 = vmatprep.mubr.bf16.mxu0 0
      %941 = vmatmul.mubr.bf16.gmra.mrb[0].mxu0 %v795
      %v942 = vpop.f32.mrb[0].mxu0
      %v943 = vadd.f32 0.0, %v942
      %v944 = vpop.f32.mrb[0].mxu0
      %v945 = vpop.f32.mrb[0].mxu0
      %v946 = vadd.f32 0.0, %v945
      %v947 = vpop.f32.mrb[0].mxu0
      %948 = vdwg.mxu0
      %v949 = vadd.f32 %v648, %v887
      %v950 = vadd.f32 %v651, %v890
      %v951 = vadd.f32 %v656, %v895
      %v952 = vadd.f32 %v659, %v898
      %v953 = vadd.f32 %v664, %v903
      %v954 = vadd.f32 %v667, %v906
      %v955 = vadd.f32 %v672, %v911
      %v956 = vadd.f32 %v675, %v914
      %v957 = vadd.f32 %v680, %v919
      %v958 = vadd.f32 %v683, %v922
      %v959 = vadd.f32 %v688, %v927
      %v960 = vadd.f32 %v691, %v930
      %v961 = vadd.f32 %v696, %v935
      %v962 = vadd.f32 %v699, %v938
      %v963 = vadd.f32 %v704, %v943
      %v964 = vadd.f32 %v707, %v946
      %v965 = vld [vmem:[%s2] sm:$0x1]
      %v967 = vlaneseq
      %v968 = vshrl.u32 %v967, 7
      %v969 = vsub.s32 0, %v968
      %v970 = vrot.slane %v965, %v969
      %v972 = vadd.f32 %v228, %v970
      %v973 = vadd.f32 %v229, %v970
      %v974 = vadd.f32 %v230, %v970
      %v975 = vadd.f32 %v231, %v970
      %v976 = vadd.f32 %v232, %v970
      %v977 = vadd.f32 %v233, %v970
      %v978 = vadd.f32 %v234, %v970
      %v979 = vadd.f32 %v235, %v970
      %v980 = vadd.f32 %v236, %v970
      %v981 = vadd.f32 %v237, %v970
      %v982 = vadd.f32 %v238, %v970
      %v983 = vadd.f32 %v239, %v970
      %v984 = vadd.f32 %v240, %v970
      %v985 = vadd.f32 %v241, %v970
      %v986 = vadd.f32 %v242, %v970
      %v987 = vadd.f32 %v243, %v970
      %v988 = vadd.f32 %v972, %v949
      %v989 = vadd.f32 %v973, %v950
      %v990 = vadd.f32 %v974, %v951
      %v991 = vadd.f32 %v975, %v952
      %v992 = vadd.f32 %v976, %v953
      %v993 = vadd.f32 %v977, %v954
      %v994 = vadd.f32 %v978, %v955
      %v995 = vadd.f32 %v979, %v956
      %v996 = vadd.f32 %v980, %v957
      %v997 = vadd.f32 %v981, %v958
      %v998 = vadd.f32 %v982, %v959
      %v999 = vadd.f32 %v983, %v960
      %v1000 = vadd.f32 %v984, %v961
      %v1001 = vadd.f32 %v985, %v962
      %v1002 = vadd.f32 %v986, %v963
      %v1003 = vadd.f32 %v987, %v964
      %v1004 = vmul.f32 %v988, 0.1
      %v1005 = vmul.f32 %v989, 0.1
      %v1006 = vmul.f32 %v990, 0.1
      %v1007 = vmul.f32 %v991, 0.1
      %v1008 = vmul.f32 %v992, 0.1
      %v1009 = vmul.f32 %v993, 0.1
      %v1010 = vmul.f32 %v994, 0.1
      %v1011 = vmul.f32 %v995, 0.1
      %v1012 = vmul.f32 %v996, 0.1
      %v1013 = vmul.f32 %v997, 0.1
      %v1014 = vmul.f32 %v998, 0.1
      %v1015 = vmul.f32 %v999, 0.1
      %v1016 = vmul.f32 %v1000, 0.1
      %v1017 = vmul.f32 %v1001, 0.1
      %v1018 = vmul.f32 %v1002, 0.1
      %v1019 = vmul.f32 %v1003, 0.1
      %v1020 = vmax.f32 %v988, %v1004
      %v1021 = vmax.f32 %v989, %v1005
      %v1022 = vmax.f32 %v990, %v1006
      %v1023 = vmax.f32 %v991, %v1007
      %v1024 = vmax.f32 %v992, %v1008
      %v1025 = vmax.f32 %v993, %v1009
      %v1026 = vmax.f32 %v994, %v1010
      %v1027 = vmax.f32 %v995, %v1011
      %v1028 = vmax.f32 %v996, %v1012
      %v1029 = vmax.f32 %v997, %v1013
      %v1030 = vmax.f32 %v998, %v1014
      %v1031 = vmax.f32 %v999, %v1015
      %v1032 = vmax.f32 %v1000, %v1016
      %v1033 = vmax.f32 %v1001, %v1017
      %v1034 = vmax.f32 %v1002, %v1018
      %v1035 = vmax.f32 %v1003, %v1019
      %v1036 = vpack.c.bf16 %v1021, %v1020
      %v1037 = vpack.c.bf16 %v1023, %v1022
      %v1038 = vpack.c.bf16 %v1025, %v1024
      %v1039 = vpack.c.bf16 %v1027, %v1026
      %v1040 = vpack.c.bf16 %v1029, %v1028
      %v1041 = vpack.c.bf16 %v1031, %v1030
      %v1042 = vpack.c.bf16 %v1033, %v1032
      %v1043 = vpack.c.bf16 %v1035, %v1034
      %1044 = vst [vmem:[#allocation2 + $0x8] sm:$0xff] %v1036
      %1045 = vst [vmem:[#allocation2 + $0x10] sm:$0xff] %v1037
      %1046 = vst [vmem:[#allocation2 + $0x18] sm:$0xff] %v1038
      %1047 = vst [vmem:[#allocation2 + $0x20] sm:$0xff] %v1039
      %1048 = vst [vmem:[#allocation2 + $0x28] sm:$0xff] %v1040
      %1049 = vst [vmem:[#allocation2 + $0x30] sm:$0xff] %v1041
      %1050 = vst [vmem:[#allocation2 + $0x38] sm:$0xff] %v1042
      %1051 = vst [vmem:[#allocation2 + $0x40] sm:$0xff] %v1043
      %v1052 = vld [vmem:[#allocation2] sm:$0xc0]
      %v1053 = vld [vmem:[#allocation2 + $0x8] sm:$0xff]
      %v1054 = vld [vmem:[#allocation2 + $0x10] sm:$0xff]
      %v1055 = vld [vmem:[#allocation2 + $0x18] sm:$0xff]
      %v1056 = vld [vmem:[#allocation2 + $0x20] sm:$0xff]
      %v1057 = vld [vmem:[#allocation2 + $0x28] sm:$0xff]
      %v1058 = vld [vmem:[#allocation2 + $0x30] sm:$0xff]
      %v1059 = vld [vmem:[#allocation2 + $0x38] sm:$0xff]
      %v1060 = vld [vmem:[#allocation2 + $0x40] sm:$0x7f]
      %v1061 = vld [vmem:[#allocation2 + $0x8] sm:$0xfe]
      %v1062 = vld [vmem:[#allocation2 + $0x10] sm:$0xff]
      %v1063 = vld [vmem:[#allocation2 + $0x18] sm:$0xff]
      %v1064 = vld [vmem:[#allocation2 + $0x20] sm:$0xff]
      %v1065 = vld [vmem:[#allocation2 + $0x28] sm:$0xff]
      %v1066 = vld [vmem:[#allocation2 + $0x30] sm:$0xff]
      %v1067 = vld [vmem:[#allocation2 + $0x38] sm:$0xff]
      %v1068 = vld [vmem:[#allocation2 + $0x40] sm:$0xff]
      %v1069 = vld [vmem:[#allocation2 + $0x48] sm:$0x3]
      %v1070 = vld [vmem:[%s3] sm:$0xf]
      %v1071 = vld [vmem:[%s3 + $0x4] sm:$0xf]
      %v1072 = vld [vmem:[%s3 + $0x8] sm:$0xf]
      %v1073 = vld [vmem:[%s3 + $0xc] sm:$0xf]
      %v1074 = vld [vmem:[%s3 + $0x10] sm:$0xf]
      %v1075 = vld [vmem:[%s3 + $0x14] sm:$0xf]
      %v1076 = vld [vmem:[%s3 + $0x18] sm:$0xf]
      %v1077 = vld [vmem:[%s3 + $0x1c] sm:$0xf]
      %v1078 = vld [vmem:[%s3 + $0x20] sm:$0xf]
      %v1079 = vld [vmem:[%s3 + $0x24] sm:$0xf]
      %v1080 = vld [vmem:[%s3 + $0x28] sm:$0xf]
      %v1081 = vld [vmem:[%s3 + $0x2c] sm:$0xf]
      %v1082 = vld [vmem:[%s3 + $0x30] sm:$0xf]
      %v1083 = vld [vmem:[%s3 + $0x34] sm:$0xf]
      %v1084 = vld [vmem:[%s3 + $0x38] sm:$0xf]
      %v1085 = vld [vmem:[%s3 + $0x3c] sm:$0xf]
      %s1086 = scalar_lea.vmem %s3, 64
      %v1087 = vld [vmem:[%s1086] sm:$0xf]
      %v1088 = vld [vmem:[%s1086 + $0x4] sm:$0xf]
      %v1089 = vld [vmem:[%s1086 + $0x8] sm:$0xf]
      %v1090 = vld [vmem:[%s1086 + $0xc] sm:$0xf]
      %v1091 = vld [vmem:[%s1086 + $0x10] sm:$0xf]
      %v1092 = vld [vmem:[%s1086 + $0x14] sm:$0xf]
      %v1093 = vld [vmem:[%s1086 + $0x18] sm:$0xf]
      %v1094 = vld [vmem:[%s1086 + $0x1c] sm:$0xf]
      %v1095 = vld [vmem:[%s1086 + $0x20] sm:$0xf]
      %v1096 = vld [vmem:[%s1086 + $0x24] sm:$0xf]
      %v1097 = vld [vmem:[%s1086 + $0x28] sm:$0xf]
      %v1098 = vld [vmem:[%s1086 + $0x2c] sm:$0xf]
      %v1099 = vld [vmem:[%s1086 + $0x30] sm:$0xf]
      %v1100 = vld [vmem:[%s1086 + $0x34] sm:$0xf]
      %v1101 = vld [vmem:[%s1086 + $0x38] sm:$0xf]
      %v1102 = vld [vmem:[%s1086 + $0x3c] sm:$0xf]
      %v1119 = vunpack.c.l.b16 %v1087
      %v1120 = vunpack.c.l.b16 %v1088
      %v1121 = vunpack.c.l.b16 %v1089
      %v1122 = vunpack.c.l.b16 %v1090
      %v1123 = vunpack.c.l.b16 %v1091
      %v1124 = vunpack.c.l.b16 %v1092
      %v1125 = vunpack.c.l.b16 %v1093
      %v1126 = vunpack.c.l.b16 %v1094
      %v1127 = vunpack.c.l.b16 %v1095
      %v1128 = vunpack.c.l.b16 %v1096
      %v1129 = vunpack.c.l.b16 %v1097
      %v1130 = vunpack.c.l.b16 %v1098
      %v1131 = vunpack.c.l.b16 %v1099
      %v1132 = vunpack.c.l.b16 %v1100
      %v1133 = vunpack.c.l.b16 %v1101
      %v1134 = vunpack.c.l.b16 %v1102
      %v1135 = vpack.c.b16 %v1120, %v1119
      %v1136 = vpack.c.b16 %v1122, %v1121
      %v1137 = vpack.c.b16 %v1124, %v1123
      %v1138 = vpack.c.b16 %v1126, %v1125
      %v1139 = vpack.c.b16 %v1128, %v1127
      %v1140 = vpack.c.b16 %v1130, %v1129
      %v1141 = vpack.c.b16 %v1132, %v1131
      %v1142 = vpack.c.b16 %v1134, %v1133
      %1151 = vmatprep.subr.bf16.mxu0 0
      %1152 = vmatpush1.bf16.msra.mxu0 %v1135
      %1153 = vmatprep.subr.bf16.mxu0 0
      %1154 = vmatpush1.bf16.msra.mxu0 %v1136
      %1155 = vmatprep.subr.bf16.mxu0 0
      %1156 = vmatpush1.bf16.msra.mxu0 %v1137
      %1157 = vmatprep.subr.bf16.mxu0 0
      %1158 = vmatpush1.bf16.msra.mxu0 %v1138
      %1159 = vmatprep.subr.bf16.mxu0 0
      %1160 = vmatpush1.bf16.msra.mxu0 %v1139
      %1161 = vmatprep.subr.bf16.mxu0 0
      %1162 = vmatpush1.bf16.msra.mxu0 %v1140
      %1163 = vmatprep.subr.bf16.mxu0 0
      %1164 = vmatpush1.bf16.msra.mxu0 %v1141
      %1165 = vmatprep.subr.bf16.mxu0 0
      %1166 = vmatpush1.bf16.msra.mxu0 %v1142
      %1167 = vmatprep.subr.bf16.mxu0 0
      %1168 = vmatpush1.bf16.msra.mxu0 0
      %1169 = vmatprep.subr.bf16.mxu0 0
      %1170 = vmatpush1.bf16.msra.mxu0 0
      %1171 = vmatprep.subr.bf16.mxu0 0
      %1172 = vmatpush1.bf16.msra.mxu0 0
      %1173 = vmatprep.subr.bf16.mxu0 0
      %1174 = vmatpush1.bf16.msra.mxu0 0
      %1175 = vmatprep.subr.bf16.mxu0 0
      %1176 = vmatpush1.bf16.msra.mxu0 0
      %1177 = vmatprep.subr.bf16.mxu0 0
      %1178 = vmatpush1.bf16.msra.mxu0 0
      %1179 = vmatprep.subr.bf16.mxu0 0
      %1180 = vmatpush1.bf16.msra.mxu0 0
      %1181 = vmatprep.subr.bf16.mxu0 0
      %1182 = vmatpush1.bf16.msra.mxu0 0
      %1183 = vmatprep.mubr.bf16.mxu0 0
      %1184 = vmatmul.mubr.bf16.gmra.mrb[0].mxu0 %v1036
      %v1185 = vpop.f32.mrb[0].mxu0
      %v1186 = vadd.f32 0.0, %v1185
      %v1187 = vpop.f32.mrb[0].mxu0
      %v1188 = vpop.f32.mrb[0].mxu0
      %v1189 = vadd.f32 0.0, %v1188
      %v1190 = vpop.f32.mrb[0].mxu0
      %1191 = vmatprep.mubr.bf16.mxu0 0
      %1192 = vmatmul.mubr.bf16.gmra.mrb[0].mxu0 %v1037
      %v1193 = vpop.f32.mrb[0].mxu0
      %v1194 = vadd.f32 0.0, %v1193
      %v1195 = vpop.f32.mrb[0].mxu0
      %v1196 = vpop.f32.mrb[0].mxu0
      %v1197 = vadd.f32 0.0, %v1196
      %v1198 = vpop.f32.mrb[0].mxu0
      %1199 = vmatprep.mubr.bf16.mxu0 0
      %1200 = vmatmul.mubr.bf16.gmra.mrb[0].mxu0 %v1038
      %v1201 = vpop.f32.mrb[0].mxu0
      %v1202 = vadd.f32 0.0, %v1201
      %v1203 = vpop.f32.mrb[0].mxu0
      %v1204 = vpop.f32.mrb[0].mxu0
      %v1205 = vadd.f32 0.0, %v1204
      %v1206 = vpop.f32.mrb[0].mxu0
      %1207 = vmatprep.mubr.bf16.mxu0 0
      %1208 = vmatmul.mubr.bf16.gmra.mrb[0].mxu0 %v1039
      %v1209 = vpop.f32.mrb[0].mxu0
      %v1210 = vadd.f32 0.0, %v1209
      %v1211 = vpop.f32.mrb[0].mxu0
      %v1212 = vpop.f32.mrb[0].mxu0
      %v1213 = vadd.f32 0.0, %v1212
      %v1214 = vpop.f32.mrb[0].mxu0
      %1215 = vmatprep.mubr.bf16.mxu0 0
      %1216 = vmatmul.mubr.bf16.gmra.mrb[0].mxu0 %v1040
      %v1217 = vpop.f32.mrb[0].mxu0
      %v1218 = vadd.f32 0.0, %v1217
      %v1219 = vpop.f32.mrb[0].mxu0
      %v1220 = vpop.f32.mrb[0].mxu0
      %v1221 = vadd.f32 0.0, %v1220
      %v1222 = vpop.f32.mrb[0].mxu0
      %1223 = vmatprep.mubr.bf16.mxu0 0
      %1224 = vmatmul.mubr.bf16.gmra.mrb[0].mxu0 %v1041
      %v1225 = vpop.f32.mrb[0].mxu0
      %v1226 = vadd.f32 0.0, %v1225
      %v1227 = vpop.f32.mrb[0].mxu0
      %v1228 = vpop.f32.mrb[0].mxu0
      %v1229 = vadd.f32 0.0, %v1228
      %v1230 = vpop.f32.mrb[0].mxu0
      %1231 = vmatprep.mubr.bf16.mxu0 0
      %1232 = vmatmul.mubr.bf16.gmra.mrb[0].mxu0 %v1042
      %v1233 = vpop.f32.mrb[0].mxu0
      %v1234 = vadd.f32 0.0, %v1233
      %v1235 = vpop.f32.mrb[0].mxu0
      %v1236 = vpop.f32.mrb[0].mxu0
      %v1237 = vadd.f32 0.0, %v1236
      %v1238 = vpop.f32.mrb[0].mxu0
      %1239 = vmatprep.mubr.bf16.mxu0 0
      %1240 = vmatmul.mubr.bf16.gmra.mrb[0].mxu0 %v1043
      %v1241 = vpop.f32.mrb[0].mxu0
      %v1242 = vadd.f32 0.0, %v1241
      %v1243 = vpop.f32.mrb[0].mxu0
      %v1244 = vpop.f32.mrb[0].mxu0
      %v1245 = vadd.f32 0.0, %v1244
      %v1246 = vpop.f32.mrb[0].mxu0
      %1247 = vdwg.mxu0
      %vm1248 = vsmask.f32 1280
      %v1250 = vshrl.u32 %v1052, 16
      %v1252 = vrot.slane %v1250, 6
      %v1253 = vshll.u32 %v1052, 16
      %v1255 = vrot.slane %v1253, 7
      %v1256 = vor.u32 %v1252, %v1255
      %v1258 = vshrl.u32 %v1053, 16
      %v1260 = vrot.slane %v1258, 6
      %v1261 = vshll.u32 %v1053, 16
      %v1263 = vrot.slane %v1261, 7
      %v1264 = vor.u32 %v1260, %v1263
      %v1265 = vsel %vm1248, %v1256, %v1264
      %v1267 = vshrl.u32 %v1054, 16
      %v1269 = vrot.slane %v1267, 6
      %v1270 = vshll.u32 %v1054, 16
      %v1272 = vrot.slane %v1270, 7
      %v1273 = vor.u32 %v1269, %v1272
      %v1274 = vsel %vm1248, %v1264, %v1273
      %v1276 = vshrl.u32 %v1055, 16
      %v1278 = vrot.slane %v1276, 6
      %v1279 = vshll.u32 %v1055, 16
      %v1281 = vrot.slane %v1279, 7
      %v1282 = vor.u32 %v1278, %v1281
      %v1283 = vsel %vm1248, %v1273, %v1282
      %v1285 = vshrl.u32 %v1056, 16
      %v1287 = vrot.slane %v1285, 6
      %v1288 = vshll.u32 %v1056, 16
      %v1290 = vrot.slane %v1288, 7
      %v1291 = vor.u32 %v1287, %v1290
      %v1292 = vsel %vm1248, %v1282, %v1291
      %v1294 = vshrl.u32 %v1057, 16
      %v1296 = vrot.slane %v1294, 6
      %v1297 = vshll.u32 %v1057, 16
      %v1299 = vrot.slane %v1297, 7
      %v1300 = vor.u32 %v1296, %v1299
      %v1301 = vsel %vm1248, %v1291, %v1300
      %v1303 = vshrl.u32 %v1058, 16
      %v1305 = vrot.slane %v1303, 6
      %v1306 = vshll.u32 %v1058, 16
      %v1308 = vrot.slane %v1306, 7
      %v1309 = vor.u32 %v1305, %v1308
      %v1310 = vsel %vm1248, %v1300, %v1309
      %v1312 = vshrl.u32 %v1059, 16
      %v1314 = vrot.slane %v1312, 6
      %v1315 = vshll.u32 %v1059, 16
      %v1317 = vrot.slane %v1315, 7
      %v1318 = vor.u32 %v1314, %v1317
      %v1319 = vsel %vm1248, %v1309, %v1318
      %v1321 = vshrl.u32 %v1060, 16
      %v1323 = vrot.slane %v1321, 6
      %v1324 = vshll.u32 %v1060, 16
      %v1326 = vrot.slane %v1324, 7
      %v1327 = vor.u32 %v1323, %v1326
      %v1328 = vsel %vm1248, %v1318, %v1327
      %v1353 = vunpack.c.l.b16 %v1070
      %v1354 = vunpack.c.l.b16 %v1071
      %v1355 = vunpack.c.l.b16 %v1072
      %v1356 = vunpack.c.l.b16 %v1073
      %v1357 = vunpack.c.l.b16 %v1074
      %v1358 = vunpack.c.l.b16 %v1075
      %v1359 = vunpack.c.l.b16 %v1076
      %v1360 = vunpack.c.l.b16 %v1077
      %v1361 = vunpack.c.l.b16 %v1078
      %v1362 = vunpack.c.l.b16 %v1079
      %v1363 = vunpack.c.l.b16 %v1080
      %v1364 = vunpack.c.l.b16 %v1081
      %v1365 = vunpack.c.l.b16 %v1082
      %v1366 = vunpack.c.l.b16 %v1083
      %v1367 = vunpack.c.l.b16 %v1084
      %v1368 = vunpack.c.l.b16 %v1085
      %v1369 = vpack.c.b16 %v1354, %v1353
      %v1370 = vpack.c.b16 %v1356, %v1355
      %v1371 = vpack.c.b16 %v1358, %v1357
      %v1372 = vpack.c.b16 %v1360, %v1359
      %v1373 = vpack.c.b16 %v1362, %v1361
      %v1374 = vpack.c.b16 %v1364, %v1363
      %v1375 = vpack.c.b16 %v1366, %v1365
      %v1376 = vpack.c.b16 %v1368, %v1367
      %1385 = vmatprep.subr.bf16.mxu0 0
      %1386 = vmatpush1.bf16.msra.mxu0 %v1369
      %1387 = vmatprep.subr.bf16.mxu0 0
      %1388 = vmatpush1.bf16.msra.mxu0 %v1370
      %1389 = vmatprep.subr.bf16.mxu0 0
      %1390 = vmatpush1.bf16.msra.mxu0 %v1371
      %1391 = vmatprep.subr.bf16.mxu0 0
      %1392 = vmatpush1.bf16.msra.mxu0 %v1372
      %1393 = vmatprep.subr.bf16.mxu0 0
      %1394 = vmatpush1.bf16.msra.mxu0 %v1373
      %1395 = vmatprep.subr.bf16.mxu0 0
      %1396 = vmatpush1.bf16.msra.mxu0 %v1374
      %1397 = vmatprep.subr.bf16.mxu0 0
      %1398 = vmatpush1.bf16.msra.mxu0 %v1375
      %1399 = vmatprep.subr.bf16.mxu0 0
      %1400 = vmatpush1.bf16.msra.mxu0 %v1376
      %1401 = vmatprep.subr.bf16.mxu0 0
      %1402 = vmatpush1.bf16.msra.mxu0 0
      %1403 = vmatprep.subr.bf16.mxu0 0
      %1404 = vmatpush1.bf16.msra.mxu0 0
      %1405 = vmatprep.subr.bf16.mxu0 0
      %1406 = vmatpush1.bf16.msra.mxu0 0
      %1407 = vmatprep.subr.bf16.mxu0 0
      %1408 = vmatpush1.bf16.msra.mxu0 0
      %1409 = vmatprep.subr.bf16.mxu0 0
      %1410 = vmatpush1.bf16.msra.mxu0 0
      %1411 = vmatprep.subr.bf16.mxu0 0
      %1412 = vmatpush1.bf16.msra.mxu0 0
      %1413 = vmatprep.subr.bf16.mxu0 0
      %1414 = vmatpush1.bf16.msra.mxu0 0
      %1415 = vmatprep.subr.bf16.mxu0 0
      %1416 = vmatpush1.bf16.msra.mxu0 0
      %1417 = vmatprep.mubr.bf16.mxu0 0
      %1418 = vmatmul.mubr.bf16.gmra.mrb[0].mxu0 %v1265
      %v1419 = vpop.f32.mrb[0].mxu0
      %v1420 = vadd.f32 %v1186, %v1419
      %v1421 = vpop.f32.mrb[0].mxu0
      %v1422 = vpop.f32.mrb[0].mxu0
      %v1423 = vadd.f32 %v1189, %v1422
      %v1424 = vpop.f32.mrb[0].mxu0
      %1425 = vmatprep.mubr.bf16.mxu0 0
      %1426 = vmatmul.mubr.bf16.gmra.mrb[0].mxu0 %v1274
      %v1427 = vpop.f32.mrb[0].mxu0
      %v1428 = vadd.f32 %v1194, %v1427
      %v1429 = vpop.f32.mrb[0].mxu0
      %v1430 = vpop.f32.mrb[0].mxu0
      %v1431 = vadd.f32 %v1197, %v1430
      %v1432 = vpop.f32.mrb[0].mxu0
      %1433 = vmatprep.mubr.bf16.mxu0 0
      %1434 = vmatmul.mubr.bf16.gmra.mrb[0].mxu0 %v1283
      %v1435 = vpop.f32.mrb[0].mxu0
      %v1436 = vadd.f32 %v1202, %v1435
      %v1437 = vpop.f32.mrb[0].mxu0
      %v1438 = vpop.f32.mrb[0].mxu0
      %v1439 = vadd.f32 %v1205, %v1438
      %v1440 = vpop.f32.mrb[0].mxu0
      %1441 = vmatprep.mubr.bf16.mxu0 0
      %1442 = vmatmul.mubr.bf16.gmra.mrb[0].mxu0 %v1292
      %v1443 = vpop.f32.mrb[0].mxu0
      %v1444 = vadd.f32 %v1210, %v1443
      %v1445 = vpop.f32.mrb[0].mxu0
      %v1446 = vpop.f32.mrb[0].mxu0
      %v1447 = vadd.f32 %v1213, %v1446
      %v1448 = vpop.f32.mrb[0].mxu0
      %1449 = vmatprep.mubr.bf16.mxu0 0
      %1450 = vmatmul.mubr.bf16.gmra.mrb[0].mxu0 %v1301
      %v1451 = vpop.f32.mrb[0].mxu0
      %v1452 = vadd.f32 %v1218, %v1451
      %v1453 = vpop.f32.mrb[0].mxu0
      %v1454 = vpop.f32.mrb[0].mxu0
      %v1455 = vadd.f32 %v1221, %v1454
      %v1456 = vpop.f32.mrb[0].mxu0
      %1457 = vmatprep.mubr.bf16.mxu0 0
      %1458 = vmatmul.mubr.bf16.gmra.mrb[0].mxu0 %v1310
      %v1459 = vpop.f32.mrb[0].mxu0
      %v1460 = vadd.f32 %v1226, %v1459
      %v1461 = vpop.f32.mrb[0].mxu0
      %v1462 = vpop.f32.mrb[0].mxu0
      %v1463 = vadd.f32 %v1229, %v1462
      %v1464 = vpop.f32.mrb[0].mxu0
      %1465 = vmatprep.mubr.bf16.mxu0 0
      %1466 = vmatmul.mubr.bf16.gmra.mrb[0].mxu0 %v1319
      %v1467 = vpop.f32.mrb[0].mxu0
      %v1468 = vadd.f32 %v1234, %v1467
      %v1469 = vpop.f32.mrb[0].mxu0
      %v1470 = vpop.f32.mrb[0].mxu0
      %v1471 = vadd.f32 %v1237, %v1470
      %v1472 = vpop.f32.mrb[0].mxu0
      %1473 = vmatprep.mubr.bf16.mxu0 0
      %1474 = vmatmul.mubr.bf16.gmra.mrb[0].mxu0 %v1328
      %v1475 = vpop.f32.mrb[0].mxu0
      %v1476 = vadd.f32 %v1242, %v1475
      %v1477 = vpop.f32.mrb[0].mxu0
      %v1478 = vpop.f32.mrb[0].mxu0
      %v1479 = vadd.f32 %v1245, %v1478
      %v1480 = vpop.f32.mrb[0].mxu0
      %1481 = vdwg.mxu0
      %s1482 = scalar_lea.vmem %s3, 128
      %v1483 = vld [vmem:[%s1482] sm:$0xf]
      %v1484 = vld [vmem:[%s1482 + $0x4] sm:$0xf]
      %v1485 = vld [vmem:[%s1482 + $0x8] sm:$0xf]
      %v1486 = vld [vmem:[%s1482 + $0xc] sm:$0xf]
      %v1487 = vld [vmem:[%s1482 + $0x10] sm:$0xf]
      %v1488 = vld [vmem:[%s1482 + $0x14] sm:$0xf]
      %v1489 = vld [vmem:[%s1482 + $0x18] sm:$0xf]
      %v1490 = vld [vmem:[%s1482 + $0x1c] sm:$0xf]
      %v1491 = vld [vmem:[%s1482 + $0x20] sm:$0xf]
      %v1492 = vld [vmem:[%s1482 + $0x24] sm:$0xf]
      %v1493 = vld [vmem:[%s1482 + $0x28] sm:$0xf]
      %v1494 = vld [vmem:[%s1482 + $0x2c] sm:$0xf]
      %v1495 = vld [vmem:[%s1482 + $0x30] sm:$0xf]
      %v1496 = vld [vmem:[%s1482 + $0x34] sm:$0xf]
      %v1497 = vld [vmem:[%s1482 + $0x38] sm:$0xf]
      %v1498 = vld [vmem:[%s1482 + $0x3c] sm:$0xf]
      %vm1499 = vsmask.f32 6400
      %v1501 = vshrl.u32 %v1061, 16
      %v1503 = vrot.slane %v1501, 1
      %v1504 = vshll.u32 %v1061, 16
      %v1506 = vrot.slane %v1504, 2
      %v1507 = vor.u32 %v1503, %v1506
      %v1509 = vshrl.u32 %v1062, 16
      %v1511 = vrot.slane %v1509, 1
      %v1512 = vshll.u32 %v1062, 16
      %v1514 = vrot.slane %v1512, 2
      %v1515 = vor.u32 %v1511, %v1514
      %v1516 = vsel %vm1499, %v1507, %v1515
      %v1518 = vshrl.u32 %v1063, 16
      %v1520 = vrot.slane %v1518, 1
      %v1521 = vshll.u32 %v1063, 16
      %v1523 = vrot.slane %v1521, 2
      %v1524 = vor.u32 %v1520, %v1523
      %v1525 = vsel %vm1499, %v1515, %v1524
      %v1527 = vshrl.u32 %v1064, 16
      %v1529 = vrot.slane %v1527, 1
      %v1530 = vshll.u32 %v1064, 16
      %v1532 = vrot.slane %v1530, 2
      %v1533 = vor.u32 %v1529, %v1532
      %v1534 = vsel %vm1499, %v1524, %v1533
      %v1536 = vshrl.u32 %v1065, 16
      %v1538 = vrot.slane %v1536, 1
      %v1539 = vshll.u32 %v1065, 16
      %v1541 = vrot.slane %v1539, 2
      %v1542 = vor.u32 %v1538, %v1541
      %v1543 = vsel %vm1499, %v1533, %v1542
      %v1545 = vshrl.u32 %v1066, 16
      %v1547 = vrot.slane %v1545, 1
      %v1548 = vshll.u32 %v1066, 16
      %v1550 = vrot.slane %v1548, 2
      %v1551 = vor.u32 %v1547, %v1550
      %v1552 = vsel %vm1499, %v1542, %v1551
      %v1554 = vshrl.u32 %v1067, 16
      %v1556 = vrot.slane %v1554, 1
      %v1557 = vshll.u32 %v1067, 16
      %v1559 = vrot.slane %v1557, 2
      %v1560 = vor.u32 %v1556, %v1559
      %v1561 = vsel %vm1499, %v1551, %v1560
      %v1563 = vshrl.u32 %v1068, 16
      %v1565 = vrot.slane %v1563, 1
      %v1566 = vshll.u32 %v1068, 16
      %v1568 = vrot.slane %v1566, 2
      %v1569 = vor.u32 %v1565, %v1568
      %v1570 = vsel %vm1499, %v1560, %v1569
      %v1572 = vshrl.u32 %v1069, 16
      %v1574 = vrot.slane %v1572, 1
      %v1575 = vshll.u32 %v1069, 16
      %v1577 = vrot.slane %v1575, 2
      %v1578 = vor.u32 %v1574, %v1577
      %v1579 = vsel %vm1499, %v1569, %v1578
      %v1604 = vunpack.c.l.b16 %v1483
      %v1605 = vunpack.c.l.b16 %v1484
      %v1606 = vunpack.c.l.b16 %v1485
      %v1607 = vunpack.c.l.b16 %v1486
      %v1608 = vunpack.c.l.b16 %v1487
      %v1609 = vunpack.c.l.b16 %v1488
      %v1610 = vunpack.c.l.b16 %v1489
      %v1611 = vunpack.c.l.b16 %v1490
      %v1612 = vunpack.c.l.b16 %v1491
      %v1613 = vunpack.c.l.b16 %v1492
      %v1614 = vunpack.c.l.b16 %v1493
      %v1615 = vunpack.c.l.b16 %v1494
      %v1616 = vunpack.c.l.b16 %v1495
      %v1617 = vunpack.c.l.b16 %v1496
      %v1618 = vunpack.c.l.b16 %v1497
      %v1619 = vunpack.c.l.b16 %v1498
      %v1620 = vpack.c.b16 %v1605, %v1604
      %v1621 = vpack.c.b16 %v1607, %v1606
      %v1622 = vpack.c.b16 %v1609, %v1608
      %v1623 = vpack.c.b16 %v1611, %v1610
      %v1624 = vpack.c.b16 %v1613, %v1612
      %v1625 = vpack.c.b16 %v1615, %v1614
      %v1626 = vpack.c.b16 %v1617, %v1616
      %v1627 = vpack.c.b16 %v1619, %v1618
      %1636 = vmatprep.subr.bf16.mxu0 0
      %1637 = vmatpush1.bf16.msra.mxu0 %v1620
      %1638 = vmatprep.subr.bf16.mxu0 0
      %1639 = vmatpush1.bf16.msra.mxu0 %v1621
      %1640 = vmatprep.subr.bf16.mxu0 0
      %1641 = vmatpush1.bf16.msra.mxu0 %v1622
      %1642 = vmatprep.subr.bf16.mxu0 0
      %1643 = vmatpush1.bf16.msra.mxu0 %v1623
      %1644 = vmatprep.subr.bf16.mxu0 0
      %1645 = vmatpush1.bf16.msra.mxu0 %v1624
      %1646 = vmatprep.subr.bf16.mxu0 0
      %1647 = vmatpush1.bf16.msra.mxu0 %v1625
      %1648 = vmatprep.subr.bf16.mxu0 0
      %1649 = vmatpush1.bf16.msra.mxu0 %v1626
      %1650 = vmatprep.subr.bf16.mxu0 0
      %1651 = vmatpush1.bf16.msra.mxu0 %v1627
      %1652 = vmatprep.subr.bf16.mxu0 0
      %1653 = vmatpush1.bf16.msra.mxu0 0
      %1654 = vmatprep.subr.bf16.mxu0 0
      %1655 = vmatpush1.bf16.msra.mxu0 0
      %1656 = vmatprep.subr.bf16.mxu0 0
      %1657 = vmatpush1.bf16.msra.mxu0 0
      %1658 = vmatprep.subr.bf16.mxu0 0
      %1659 = vmatpush1.bf16.msra.mxu0 0
      %1660 = vmatprep.subr.bf16.mxu0 0
      %1661 = vmatpush1.bf16.msra.mxu0 0
      %1662 = vmatprep.subr.bf16.mxu0 0
      %1663 = vmatpush1.bf16.msra.mxu0 0
      %1664 = vmatprep.subr.bf16.mxu0 0
      %1665 = vmatpush1.bf16.msra.mxu0 0
      %1666 = vmatprep.subr.bf16.mxu0 0
      %1667 = vmatpush1.bf16.msra.mxu0 0
      %1668 = vmatprep.mubr.bf16.mxu0 0
      %1669 = vmatmul.mubr.bf16.gmra.mrb[0].mxu0 %v1516
      %v1670 = vpop.f32.mrb[0].mxu0
      %v1671 = vadd.f32 0.0, %v1670
      %v1672 = vpop.f32.mrb[0].mxu0
      %v1673 = vpop.f32.mrb[0].mxu0
      %v1674 = vadd.f32 0.0, %v1673
      %v1675 = vpop.f32.mrb[0].mxu0
      %1676 = vmatprep.mubr.bf16.mxu0 0
      %1677 = vmatmul.mubr.bf16.gmra.mrb[0].mxu0 %v1525
      %v1678 = vpop.f32.mrb[0].mxu0
      %v1679 = vadd.f32 0.0, %v1678
      %v1680 = vpop.f32.mrb[0].mxu0
      %v1681 = vpop.f32.mrb[0].mxu0
      %v1682 = vadd.f32 0.0, %v1681
      %v1683 = vpop.f32.mrb[0].mxu0
      %1684 = vmatprep.mubr.bf16.mxu0 0
      %1685 = vmatmul.mubr.bf16.gmra.mrb[0].mxu0 %v1534
      %v1686 = vpop.f32.mrb[0].mxu0
      %v1687 = vadd.f32 0.0, %v1686
      %v1688 = vpop.f32.mrb[0].mxu0
      %v1689 = vpop.f32.mrb[0].mxu0
      %v1690 = vadd.f32 0.0, %v1689
      %v1691 = vpop.f32.mrb[0].mxu0
      %1692 = vmatprep.mubr.bf16.mxu0 0
      %1693 = vmatmul.mubr.bf16.gmra.mrb[0].mxu0 %v1543
      %v1694 = vpop.f32.mrb[0].mxu0
      %v1695 = vadd.f32 0.0, %v1694
      %v1696 = vpop.f32.mrb[0].mxu0
      %v1697 = vpop.f32.mrb[0].mxu0
      %v1698 = vadd.f32 0.0, %v1697
      %v1699 = vpop.f32.mrb[0].mxu0
      %1700 = vmatprep.mubr.bf16.mxu0 0
      %1701 = vmatmul.mubr.bf16.gmra.mrb[0].mxu0 %v1552
      %v1702 = vpop.f32.mrb[0].mxu0
      %v1703 = vadd.f32 0.0, %v1702
      %v1704 = vpop.f32.mrb[0].mxu0
      %v1705 = vpop.f32.mrb[0].mxu0
      %v1706 = vadd.f32 0.0, %v1705
      %v1707 = vpop.f32.mrb[0].mxu0
      %1708 = vmatprep.mubr.bf16.mxu0 0
      %1709 = vmatmul.mubr.bf16.gmra.mrb[0].mxu0 %v1561
      %v1710 = vpop.f32.mrb[0].mxu0
      %v1711 = vadd.f32 0.0, %v1710
      %v1712 = vpop.f32.mrb[0].mxu0
      %v1713 = vpop.f32.mrb[0].mxu0
      %v1714 = vadd.f32 0.0, %v1713
      %v1715 = vpop.f32.mrb[0].mxu0
      %1716 = vmatprep.mubr.bf16.mxu0 0
      %1717 = vmatmul.mubr.bf16.gmra.mrb[0].mxu0 %v1570
      %v1718 = vpop.f32.mrb[0].mxu0
      %v1719 = vadd.f32 0.0, %v1718
      %v1720 = vpop.f32.mrb[0].mxu0
      %v1721 = vpop.f32.mrb[0].mxu0
      %v1722 = vadd.f32 0.0, %v1721
      %v1723 = vpop.f32.mrb[0].mxu0
      %1724 = vmatprep.mubr.bf16.mxu0 0
      %1725 = vmatmul.mubr.bf16.gmra.mrb[0].mxu0 %v1579
      %v1726 = vpop.f32.mrb[0].mxu0
      %v1727 = vadd.f32 0.0, %v1726
      %v1728 = vpop.f32.mrb[0].mxu0
      %v1729 = vpop.f32.mrb[0].mxu0
      %v1730 = vadd.f32 0.0, %v1729
      %v1731 = vpop.f32.mrb[0].mxu0
      %1732 = vdwg.mxu0
      %v1733 = vadd.f32 %v1420, %v1671
      %v1734 = vadd.f32 %v1423, %v1674
      %v1735 = vadd.f32 %v1428, %v1679
      %v1736 = vadd.f32 %v1431, %v1682
      %v1737 = vadd.f32 %v1436, %v1687
      %v1738 = vadd.f32 %v1439, %v1690
      %v1739 = vadd.f32 %v1444, %v1695
      %v1740 = vadd.f32 %v1447, %v1698
      %v1741 = vadd.f32 %v1452, %v1703
      %v1742 = vadd.f32 %v1455, %v1706
      %v1743 = vadd.f32 %v1460, %v1711
      %v1744 = vadd.f32 %v1463, %v1714
      %v1745 = vadd.f32 %v1468, %v1719
      %v1746 = vadd.f32 %v1471, %v1722
      %v1747 = vadd.f32 %v1476, %v1727
      %v1748 = vadd.f32 %v1479, %v1730
      %v1749 = vld [vmem:[%s4] sm:$0x1]
      %v1751 = vlaneseq
      %v1752 = vshrl.u32 %v1751, 7
      %v1753 = vsub.s32 0, %v1752
      %v1754 = vrot.slane %v1749, %v1753
      %v1756 = vadd.f32 %v988, %v1754
      %v1757 = vadd.f32 %v989, %v1754
      %v1758 = vadd.f32 %v990, %v1754
      %v1759 = vadd.f32 %v991, %v1754
      %v1760 = vadd.f32 %v992, %v1754
      %v1761 = vadd.f32 %v993, %v1754
      %v1762 = vadd.f32 %v994, %v1754
      %v1763 = vadd.f32 %v995, %v1754
      %v1764 = vadd.f32 %v996, %v1754
      %v1765 = vadd.f32 %v997, %v1754
      %v1766 = vadd.f32 %v998, %v1754
      %v1767 = vadd.f32 %v999, %v1754
      %v1768 = vadd.f32 %v1000, %v1754
      %v1769 = vadd.f32 %v1001, %v1754
      %v1770 = vadd.f32 %v1002, %v1754
      %v1771 = vadd.f32 %v1003, %v1754
      %v1772 = vadd.f32 %v1756, %v1733
      %v1773 = vadd.f32 %v1757, %v1734
      %v1774 = vadd.f32 %v1758, %v1735
      %v1775 = vadd.f32 %v1759, %v1736
      %v1776 = vadd.f32 %v1760, %v1737
      %v1777 = vadd.f32 %v1761, %v1738
      %v1778 = vadd.f32 %v1762, %v1739
      %v1779 = vadd.f32 %v1763, %v1740
      %v1780 = vadd.f32 %v1764, %v1741
      %v1781 = vadd.f32 %v1765, %v1742
      %v1782 = vadd.f32 %v1766, %v1743
      %v1783 = vadd.f32 %v1767, %v1744
      %v1784 = vadd.f32 %v1768, %v1745
      %v1785 = vadd.f32 %v1769, %v1746
      %v1786 = vadd.f32 %v1770, %v1747
      %v1787 = vadd.f32 %v1771, %v1748
      %1788 = vst [vmem:[%s224] sm:$0xff] %v1772
      %1789 = vst [vmem:[%s224 + $0x8] sm:$0xff] %v1773
      %1790 = vst [vmem:[%s224 + $0x10] sm:$0xff] %v1774
      %1791 = vst [vmem:[%s224 + $0x18] sm:$0xff] %v1775
      %1792 = vst [vmem:[%s224 + $0x20] sm:$0xff] %v1776
      %1793 = vst [vmem:[%s224 + $0x28] sm:$0xff] %v1777
      %1794 = vst [vmem:[%s224 + $0x30] sm:$0xff] %v1778
      %1795 = vst [vmem:[%s224 + $0x38] sm:$0xff] %v1779
      %1796 = vst [vmem:[%s224 + $0x40] sm:$0xff] %v1780
      %1797 = vst [vmem:[%s224 + $0x48] sm:$0xff] %v1781
      %1798 = vst [vmem:[%s224 + $0x50] sm:$0xff] %v1782
      %1799 = vst [vmem:[%s224 + $0x58] sm:$0xff] %v1783
      %1800 = vst [vmem:[%s224 + $0x60] sm:$0xff] %v1784
      %1801 = vst [vmem:[%s224 + $0x68] sm:$0xff] %v1785
      %1802 = vst [vmem:[%s224 + $0x70] sm:$0xff] %v1786
      %1803 = vst [vmem:[%s224 + $0x78] sm:$0xff] %v1787
      %p1804 = scmp.lt.s32.totalorder %s16, 1
      %s1805 = scalar_select %p1804, %s16, 1
      %s1806 = smul.addr %s1805, 16
      %s1807 = smul.addr %s1806, 8
      %s1808 = scalar_lea.vmem %s5, %s1807
      // Predicated region
      $region41: #{resblock2_forward.1} parent=39 // pred_check
        %p1809 = pneg %p144
      $region42: #{resblock2_forward.1} parent=39 // pred_check_branch
        %1811 = sbr.rel (%p1809) target = $region44
      $region43: #{resblock2_forward.1} parent=39 // pred_region
        _
      $region44: #{resblock2_forward.1} parent=39 // pred_fallthru
        _
    $region40: #{resblock2_forward.1} parent=5 // pred_fallthru
      _
    %p1812 = scmp.le.s32.totalorder 2, %s11
    // Predicated region
    $region45: #{resblock2_forward.1} parent=5 // pred_check
      %p1813 = pneg %p1812
    $region46: #{resblock2_forward.1} parent=5 // pred_check_branch
      %1815 = sbr.rel (%p1813) target = $region48
    $region47: #{resblock2_forward.1} parent=5 // pred_region
      %s1816 = ssub.s32 %s11, 2
      // Predicated region
      $region49: #{resblock2_forward.1} parent=47 // pred_check
        %p1817 = pneg %p150
      $region50: #{resblock2_forward.1} parent=47 // pred_check_branch
        %1819 = sbr.rel (%p1817) target = $region52
      $region51: #{resblock2_forward.1} parent=47 // pred_region
        %p1820 = scmp.lt.s32.totalorder %s17, 1
        %s1821 = scalar_select %p1820, %s17, 1
        %s1822 = smul.addr %s1821, 16
        %s1823 = smul.addr %s1822, 8
        %s1824 = scalar_lea.vmem %s5, %s1823
      $region52: #{resblock2_forward.1} parent=47 // pred_fallthru
        _
    $region48: #{resblock2_forward.1} parent=5 // pred_fallthru
      _
  $region6: #{resblock2_forward.1} parent=0 // loop_footer
    %s15 = sadd.s32 1, %s11
  $region7: #{resblock2_forward.1} parent=0 // loop_footer_branch
    %10 = sbr.rel target = $region3
  $region8: #{resblock2_forward.1} parent=0 // loop_exit
    _

</llo_original>
